<compile_context>
chip_gen: v5e
topology: v5e:2x2
jax: 0.10.0
libtpu: 0.0.40
codegen_flags: <defaults>
</compile_context>

<pallas_src>
import jax
import jax.numpy as jnp
from jax.experimental import pallas as pl
from jax.experimental.pallas import tpu as pltpu


def make_deepvad_kernel(num_layers: int, hidden: int):
    L, H = num_layers, hidden

    def kernel(*refs):
        (x_ref, wenc_ref, benc_ref, gamma_ref, beta_ref, mean_ref, var_ref,
         h0_ref, c0_ref) = refs[:9]
        layer_refs = [refs[9 + 3 * l: 12 + 3 * l] for l in range(L)]
        wvad_ref = refs[9 + 3 * L]
        bvad_ref = refs[10 + 3 * L]
        out_ref = refs[11 + 3 * L]
        h_scr, c_scr, seq_scr = refs[12 + 3 * L:]

        N = h0_ref.shape[1]                 # batch
        TB = x_ref.shape[0] // N            # timesteps in this block

        tb = pl.program_id(0)

        # Initialize LSTM state from (h0, c0) on the first time block.
        @pl.when(tb == 0)
        def _init():
            h_scr[...] = h0_ref[...]
            c_scr[...] = c0_ref[...]

        # --- encoder (pointwise conv) + BatchNorm1d for the WHOLE block ---
        x_flat = x_ref[...]                                       # (TB*N, C_in)
        enc = jnp.dot(x_flat, wenc_ref[...],
                      preferred_element_type=jnp.float32) + benc_ref[...]
        scale = gamma_ref[...] * jax.lax.rsqrt(var_ref[...] + 1e-5)
        shift = beta_ref[...] - mean_ref[...] * scale
        feats = enc * scale + shift                               # (TB*N, B)
        # dropout(p=0.5) is identity in eval mode.

        # Lane mask selecting the tanh gate (PyTorch order i, f, g, o) so the
        # nonlinearities run once on the full 4H-lane tile (hoisted out of the
        # unrolled loops — JAX does not CSE broadcast_in_dim).
        lane = jax.lax.broadcasted_iota(jnp.int32, (N, 4 * H), 1)
        is_g = (lane >= 2 * H) & (lane < 3 * H)

        layer_in = feats
        h_last = None
        for l in range(L):
            wih_ref, whh_ref, b_ref = layer_refs[l]
            # Batched, non-recurrent input matmul for all TB timesteps at once
            # (bias folded in here, once per block).
            ih = jnp.dot(layer_in, wih_ref[...],
                         preferred_element_type=jnp.float32) + b_ref[...]
            whh = whh_ref[...]
            h_prev = h_scr[l]                                     # (N, H)
            c_prev = c_scr[l]                                     # (N, H)
            write_seq = l < L - 1
            for t in range(TB):        # fully unrolled serial recurrence
                gates = ih[t * N:(t + 1) * N, :] + jnp.dot(
                    h_prev, whh, preferred_element_type=jnp.float32)  # (N, 4H)
                act = jnp.where(is_g, jnp.tanh(gates), jax.nn.sigmoid(gates))
                i_g = act[:, 0:H]
                f_g = act[:, H:2 * H]
                g_g = act[:, 2 * H:3 * H]
                o_g = act[:, 3 * H:4 * H]
                c_prev = f_g * c_prev + i_g * g_g
                h_prev = o_g * jnp.tanh(c_prev)
                if write_seq:
                    seq_scr[t * N:(t + 1) * N, :] = h_prev
            h_scr[l] = h_prev        # carry state into the next time block
            c_scr[l] = c_prev
            if write_seq:
                layer_in = seq_scr[...]          # (TB*N, H) -> next layer
            h_last = h_prev

        # --- out = sigmoid(Linear(out[-1])) on the final time block ---
        # Safe only because the output block index is constant over the grid
        # (single resident VMEM buffer, written back to HBM at grid end).
        @pl.when(tb == pl.num_programs(0) - 1)
        def _final():
            logits = jnp.dot(h_last, wvad_ref[...],
                             preferred_element_type=jnp.float32) + bvad_ref[...]
            out_ref[...] = jax.nn.sigmoid(logits)

    return kernel


def deepvad_audio_forward(x, h0, c0, params, t_block=None):
    N, C_in, T = x.shape
    L, _, H = h0.shape
    B = params["wenc_t"].shape[1]

    if t_block is None:
        t_block = T if T <= 32 else 8
    assert T % t_block == 0, "t_block must divide T"
    num_blocks = T // t_block
    if num_blocks > 1:
        # blocked second-minor dim of the flattened x must stay 8-aligned
        assert (t_block * N) % 8 == 0, "t_block * N must be a multiple of 8"

    # x.permute(2, 0, 1) then flatten (T, N) -> rows, so one grid block is a
    # contiguous (t_block*N, C_in) slab (no in-kernel reshape needed).
    xs = jnp.transpose(x, (2, 0, 1)).reshape(T * N, C_in)

    layer_inputs, layer_specs = [], []
    for wih_t, whh_t, b in params["layers"]:
        layer_inputs += [wih_t, whh_t, b]
        layer_specs += [
            pl.BlockSpec(wih_t.shape, lambda tb: (0, 0)),
            pl.BlockSpec(whh_t.shape, lambda tb: (0, 0)),
            pl.BlockSpec(b.shape, lambda tb: (0, 0)),
        ]

    grid_spec = pltpu.PrefetchScalarGridSpec(
        num_scalar_prefetch=0,
        grid=(num_blocks,),
        in_specs=[
            pl.BlockSpec((t_block * N, C_in), lambda tb: (tb, 0)),  # x block
            pl.BlockSpec((C_in, B), lambda tb: (0, 0)),             # enc weight
            pl.BlockSpec((1, B), lambda tb: (0, 0)),                # enc bias
            pl.BlockSpec((1, B), lambda tb: (0, 0)),                # bn gamma
            pl.BlockSpec((1, B), lambda tb: (0, 0)),                # bn beta
            pl.BlockSpec((1, B), lambda tb: (0, 0)),                # bn mean
            pl.BlockSpec((1, B), lambda tb: (0, 0)),                # bn var
            pl.BlockSpec((L, N, H), lambda tb: (0, 0, 0)),          # h0
            pl.BlockSpec((L, N, H), lambda tb: (0, 0, 0)),          # c0
            *layer_specs,                                           # LSTM weights
            pl.BlockSpec((H, 2), lambda tb: (0, 0)),                # vad weight
            pl.BlockSpec((1, 2), lambda tb: (0, 0)),                # vad bias
        ],
        out_specs=pl.BlockSpec((N, 2), lambda tb: (0, 0)),
        scratch_shapes=[
            pltpu.VMEM((L, N, H), jnp.float32),          # h state (carried)
            pltpu.VMEM((L, N, H), jnp.float32),          # c state (carried)
            pltpu.VMEM((t_block * N, H), jnp.float32),   # inter-layer sequence
        ],
    )

    return pl.pallas_call(
        make_deepvad_kernel(L, H),
        grid_spec=grid_spec,
        out_shape=jax.ShapeDtypeStruct((N, 2), jnp.float32),
        compiler_params=pltpu.CompilerParams(
            dimension_semantics=("arbitrary",),          # sequential over time
            vmem_limit_bytes=32 * 1024 * 1024),
    )(xs, params["wenc_t"], params["benc"], params["gamma"], params["beta"],
      params["rmean"], params["rvar"], h0, c0, *layer_inputs,
      params["wvad_t"], params["bvad"])


def reference_forward(x, h0, c0, p):
    """Pure-JAX reference matching the PyTorch forward (eval mode)."""
    T = x.shape[2]
    xs = jnp.transpose(x, (2, 0, 1))                            # (T, N, C_in)
    enc = xs @ p["wenc_t"] + p["benc"]                          # (T, N, B)
    inv = 1.0 / jnp.sqrt(p["rvar"] + 1e-5)
    feats = (enc - p["rmean"]) * inv * p["gamma"] + p["beta"]
    h, c = h0, c0
    inp = feats[0]
    for t in range(T):
        inp = feats[t]
        hs, cs = [], []
        for l, (wih_t, whh_t, b) in enumerate(p["layers"]):
            H = whh_t.shape[0]
            gates = inp @ wih_t + h[l] @ whh_t + b
            i_g = jax.nn.sigmoid(gates[:, :H])
            f_g = jax.nn.sigmoid(gates[:, H:2 * H])
            g_g = jnp.tanh(gates[:, 2 * H:3 * H])
            o_g = jax.nn.sigmoid(gates[:, 3 * H:4 * H])
            cn = f_g * c[l] + i_g * g_g
            hn = o_g * jnp.tanh(cn)
            hs.append(hn)
            cs.append(cn)
            inp = hn
        h, c = jnp.stack(hs), jnp.stack(cs)
    return jax.nn.sigmoid(inp @ p["wvad_t"] + p["bvad"])


def init_params(key, c_in, bottleneck, hidden, layers, std=0.02):
    ks = iter(jax.random.split(key, 8 + 4 * layers))
    p = {
        # encoder (1x1 conv) weight stored pre-transposed: (C_in, B)
        "wenc_t": std * jax.random.normal(next(ks), (c_in, bottleneck), jnp.float32),
        "benc": std * jax.random.normal(next(ks), (1, bottleneck), jnp.float32),
        # BatchNorm1d(bottleneck) affine + running stats
        "gamma": 1.0 + std * jax.random.normal(next(ks), (1, bottleneck), jnp.float32),
        "beta": std * jax.random.normal(next(ks), (1, bottleneck), jnp.float32),
        "rmean": 0.1 * jax.random.normal(next(ks), (1, bottleneck), jnp.float32),
        "rvar": 1.0 + 0.1 * jax.random.uniform(next(ks), (1, bottleneck), jnp.float32),
        # Linear(hidden, 2), stored pre-transposed: (H, 2)
        "wvad_t": std * jax.random.normal(next(ks), (hidden, 2), jnp.float32),
        "bvad": std * jax.random.normal(next(ks), (1, 2), jnp.float32),
        "layers": [],
    }
    for l in range(layers):
        in_size = bottleneck if l == 0 else hidden
        wih_t = std * jax.random.normal(next(ks), (in_size, 4 * hidden), jnp.float32)
        whh_t = std * jax.random.normal(next(ks), (hidden, 4 * hidden), jnp.float32)
        b_ih = std * jax.random.normal(next(ks), (1, 4 * hidden), jnp.float32)
        b_hh = std * jax.random.normal(next(ks), (1, 4 * hidden), jnp.float32)
        p["layers"].append((wih_t, whh_t, b_ih + b_hh))  # combined bias
    return p


if __name__ == "__main__":
    # Small, module-consistent sizes.
    N = 2          # batch_size  (pad toward >=8 real sequences in real serving)
    C_IN = 4       # raw audio channels into the (stand-in) encoder
    T = 8          # sequence length after encoding
    B = 16         # en_bottleneck_width
    H = 32         # lstm_hidden_size
    L = 2          # lstm_layers

    key = jax.random.PRNGKey(0)
    k_x, k_p = jax.random.split(key)
    x = jax.random.normal(k_x, (N, C_IN, T), jnp.float32)
    params = init_params(k_p, C_IN, B, H, L)

    # init_hidden(): zero (h, c) of shape (lstm_layers, batch, hidden)
    h0 = jnp.zeros((L, N, H), jnp.float32)
    c0 = jnp.zeros((L, N, H), jnp.float32)

    out = deepvad_audio_forward(x, h0, c0, params)
    out = jax.block_until_ready(out)

    ref = jax.block_until_ready(reference_forward(x, h0, c0, params))
    assert out.shape == (N, 2)
    assert jnp.allclose(out, ref, atol=2e-3, rtol=2e-3), (out, ref)

    print("KERNEL_OK")
</pallas_src>

<mosaic_0001>
module attributes {stable_mosaic.version = 11 : i64} {
  func.func @kernel(%arg0: i32, %arg1: memref<16x4xf32, #tpu.memory_space<vmem>>, %arg2: memref<4x16xf32, #tpu.memory_space<vmem>>, %arg3: memref<1x16xf32, #tpu.memory_space<vmem>>, %arg4: memref<1x16xf32, #tpu.memory_space<vmem>>, %arg5: memref<1x16xf32, #tpu.memory_space<vmem>>, %arg6: memref<1x16xf32, #tpu.memory_space<vmem>>, %arg7: memref<1x16xf32, #tpu.memory_space<vmem>>, %arg8: memref<2x2x32xf32, #tpu.memory_space<vmem>>, %arg9: memref<2x2x32xf32, #tpu.memory_space<vmem>>, %arg10: memref<16x128xf32, #tpu.memory_space<vmem>>, %arg11: memref<32x128xf32, #tpu.memory_space<vmem>>, %arg12: memref<1x128xf32, #tpu.memory_space<vmem>>, %arg13: memref<32x128xf32, #tpu.memory_space<vmem>>, %arg14: memref<32x128xf32, #tpu.memory_space<vmem>>, %arg15: memref<1x128xf32, #tpu.memory_space<vmem>>, %arg16: memref<32x2xf32, #tpu.memory_space<vmem>>, %arg17: memref<1x2xf32, #tpu.memory_space<vmem>>, %arg18: memref<2x2xf32, #tpu.memory_space<vmem>>, %arg19: memref<2x2x32xf32, #tpu.memory_space<vmem>>, %arg20: memref<2x2x32xf32, #tpu.memory_space<vmem>>, %arg21: memref<16x32xf32, #tpu.memory_space<vmem>>) attributes {dimension_semantics = [#tpu.dimension_semantics<arbitrary>], iteration_bounds = array<i64: 1>, scalar_prefetch = 0 : i64, scratch_operands = 3 : i64, tpu.core_type = #tpu.core_type<tc>, window_params = [{transform_indices = @transform_0, window_bounds = array<i64: 16, 4>}, {pipeline_mode = #tpu.pipeline_mode<synchronous>, transform_indices = @transform_1, window_bounds = array<i64: 4, 16>}, {pipeline_mode = #tpu.pipeline_mode<synchronous>, transform_indices = @transform_2, window_bounds = array<i64: 1, 16>}, {pipeline_mode = #tpu.pipeline_mode<synchronous>, transform_indices = @transform_3, window_bounds = array<i64: 1, 16>}, {pipeline_mode = #tpu.pipeline_mode<synchronous>, transform_indices = @transform_4, window_bounds = array<i64: 1, 16>}, {pipeline_mode = #tpu.pipeline_mode<synchronous>, transform_indices = @transform_5, window_bounds = array<i64: 1, 16>}, {pipeline_mode = #tpu.pipeline_mode<synchronous>, transform_indices = @transform_6, window_bounds = array<i64: 1, 16>}, {pipeline_mode = #tpu.pipeline_mode<synchronous>, transform_indices = @transform_7, window_bounds = array<i64: 2, 2, 32>}, {pipeline_mode = #tpu.pipeline_mode<synchronous>, transform_indices = @transform_8, window_bounds = array<i64: 2, 2, 32>}, {pipeline_mode = #tpu.pipeline_mode<synchronous>, transform_indices = @transform_9, window_bounds = array<i64: 16, 128>}, {pipeline_mode = #tpu.pipeline_mode<synchronous>, transform_indices = @transform_10, window_bounds = array<i64: 32, 128>}, {pipeline_mode = #tpu.pipeline_mode<synchronous>, transform_indices = @transform_11, window_bounds = array<i64: 1, 128>}, {pipeline_mode = #tpu.pipeline_mode<synchronous>, transform_indices = @transform_12, window_bounds = array<i64: 32, 128>}, {pipeline_mode = #tpu.pipeline_mode<synchronous>, transform_indices = @transform_13, window_bounds = array<i64: 32, 128>}, {pipeline_mode = #tpu.pipeline_mode<synchronous>, transform_indices = @transform_14, window_bounds = array<i64: 1, 128>}, {pipeline_mode = #tpu.pipeline_mode<synchronous>, transform_indices = @transform_15, window_bounds = array<i64: 32, 2>}, {pipeline_mode = #tpu.pipeline_mode<synchronous>, transform_indices = @transform_16, window_bounds = array<i64: 1, 2>}, {pipeline_mode = #tpu.pipeline_mode<synchronous>, transform_indices = @transform_17, window_bounds = array<i64: 2, 2>}]} {
    %c0_i32 = arith.constant 0 : i32
    %0 = arith.cmpi eq, %arg0, %c0_i32 : i32
    %1 = arith.extui %0 : i1 to i32
    %c0_i32_0 = arith.constant 0 : i32
    %2 = arith.cmpi ne, %1, %c0_i32_0 : i32
    scf.if %2 {
      %c0_97 = arith.constant 0 : index
      %c0_98 = arith.constant 0 : index
      %c0_99 = arith.constant 0 : index
      %377 = vector.load %arg8[%c0_97, %c0_98, %c0_99] : memref<2x2x32xf32, #tpu.memory_space<vmem>>, vector<2x2x32xf32>
      %c0_100 = arith.constant 0 : index
      %c0_101 = arith.constant 0 : index
      %c0_102 = arith.constant 0 : index
      %378 = vector.load %arg19[%c0_100, %c0_101, %c0_102] : memref<2x2x32xf32, #tpu.memory_space<vmem>>, vector<2x2x32xf32>
      tpu.vector_store %arg19[%c0_100, %c0_101, %c0_102], %377 {strides = array<i32>} : memref<2x2x32xf32, #tpu.memory_space<vmem>>, vector<2x2x32xf32>,
      %c0_103 = arith.constant 0 : index
      %c0_104 = arith.constant 0 : index
      %c0_105 = arith.constant 0 : index
      %379 = vector.load %arg9[%c0_103, %c0_104, %c0_105] : memref<2x2x32xf32, #tpu.memory_space<vmem>>, vector<2x2x32xf32>
      %c0_106 = arith.constant 0 : index
      %c0_107 = arith.constant 0 : index
      %c0_108 = arith.constant 0 : index
      %380 = vector.load %arg20[%c0_106, %c0_107, %c0_108] : memref<2x2x32xf32, #tpu.memory_space<vmem>>, vector<2x2x32xf32>
      tpu.vector_store %arg20[%c0_106, %c0_107, %c0_108], %379 {strides = array<i32>} : memref<2x2x32xf32, #tpu.memory_space<vmem>>, vector<2x2x32xf32>,
    } else {
    }
    %c0 = arith.constant 0 : index
    %c0_1 = arith.constant 0 : index
    %3 = vector.load %arg1[%c0, %c0_1] : memref<16x4xf32, #tpu.memory_space<vmem>>, vector<16x4xf32>
    %c0_2 = arith.constant 0 : index
    %c0_3 = arith.constant 0 : index
    %4 = vector.load %arg2[%c0_2, %c0_3] : memref<4x16xf32, #tpu.memory_space<vmem>>, vector<4x16xf32>
    %cst = arith.constant dense<0.000000e+00> : vector<16x16xf32>
    %5 = tpu.matmul %3, %4, %cst {dimension_numbers = #tpu.dot_dimension_numbers<[1], [0], [0], [1], [0, 0, 1, 1], [], []>} : vector<16x4xf32>, vector<4x16xf32>, vector<16x16xf32> -> vector<16x16xf32>
    %c0_4 = arith.constant 0 : index
    %c0_5 = arith.constant 0 : index
    %6 = vector.load %arg3[%c0_4, %c0_5] : memref<1x16xf32, #tpu.memory_space<vmem>>, vector<1x16xf32>
    %7 = vector.broadcast %6 : vector<1x16xf32> to vector<16x16xf32>
    %8 = arith.addf %5, %7 : vector<16x16xf32>
    %c0_6 = arith.constant 0 : index
    %c0_7 = arith.constant 0 : index
    %9 = vector.load %arg4[%c0_6, %c0_7] : memref<1x16xf32, #tpu.memory_space<vmem>>, vector<1x16xf32>
    %c0_8 = arith.constant 0 : index
    %c0_9 = arith.constant 0 : index
    %10 = vector.load %arg7[%c0_8, %c0_9] : memref<1x16xf32, #tpu.memory_space<vmem>>, vector<1x16xf32>
    %cst_10 = arith.constant 9.99999974E-6 : f32
    %11 = vector.broadcast %cst_10 : f32 to vector<1x16xf32>
    %12 = arith.addf %10, %11 : vector<1x16xf32>
    %13 = math.rsqrt %12 : vector<1x16xf32>
    %14 = arith.mulf %9, %13 : vector<1x16xf32>
    %c0_11 = arith.constant 0 : index
    %c0_12 = arith.constant 0 : index
    %15 = vector.load %arg5[%c0_11, %c0_12] : memref<1x16xf32, #tpu.memory_space<vmem>>, vector<1x16xf32>
    %c0_13 = arith.constant 0 : index
    %c0_14 = arith.constant 0 : index
    %16 = vector.load %arg6[%c0_13, %c0_14] : memref<1x16xf32, #tpu.memory_space<vmem>>, vector<1x16xf32>
    %17 = arith.mulf %16, %14 : vector<1x16xf32>
    %18 = arith.subf %15, %17 : vector<1x16xf32>
    %19 = vector.broadcast %14 : vector<1x16xf32> to vector<16x16xf32>
    %20 = arith.mulf %8, %19 : vector<16x16xf32>
    %21 = vector.broadcast %18 : vector<1x16xf32> to vector<16x16xf32>
    %22 = arith.addf %20, %21 : vector<16x16xf32>
    %23 = tpu.iota {dimensions = array<i32: 1>} : vector<2x128xi32>
    %c64_i32 = arith.constant 64 : i32
    %24 = vector.broadcast %c64_i32 : i32 to vector<2x128xi32>
    %25 = arith.cmpi sge, %23, %24 : vector<2x128xi32>
    %c96_i32 = arith.constant 96 : i32
    %26 = vector.broadcast %c96_i32 : i32 to vector<2x128xi32>
    %27 = arith.cmpi slt, %23, %26 : vector<2x128xi32>
    %28 = arith.andi %25, %27 : vector<2x128xi1>
    %c0_15 = arith.constant 0 : index
    %c0_16 = arith.constant 0 : index
    %29 = vector.load %arg10[%c0_15, %c0_16] : memref<16x128xf32, #tpu.memory_space<vmem>>, vector<16x128xf32>
    %cst_17 = arith.constant dense<0.000000e+00> : vector<16x128xf32>
    %30 = tpu.matmul %22, %29, %cst_17 {dimension_numbers = #tpu.dot_dimension_numbers<[1], [0], [0], [1], [0, 0, 1, 1], [], []>} : vector<16x16xf32>, vector<16x128xf32>, vector<16x128xf32> -> vector<16x128xf32>
    %c0_18 = arith.constant 0 : index
    %c0_19 = arith.constant 0 : index
    %31 = vector.load %arg12[%c0_18, %c0_19] : memref<1x128xf32, #tpu.memory_space<vmem>>, vector<1x128xf32>
    %32 = vector.broadcast %31 : vector<1x128xf32> to vector<16x128xf32>
    %33 = arith.addf %30, %32 : vector<16x128xf32>
    %c0_20 = arith.constant 0 : index
    %c0_21 = arith.constant 0 : index
    %34 = vector.load %arg11[%c0_20, %c0_21] : memref<32x128xf32, #tpu.memory_space<vmem>>, vector<32x128xf32>
    %c0_22 = arith.constant 0 : index
    %c0_23 = arith.constant 0 : index
    %c0_24 = arith.constant 0 : index
    %35 = vector.load %arg19[%c0_22, %c0_23, %c0_24] : memref<2x2x32xf32, #tpu.memory_space<vmem>>, vector<1x2x32xf32>
    %36 = vector.shape_cast %35 : vector<1x2x32xf32> to vector<2x32xf32>
    %c0_25 = arith.constant 0 : index
    %c0_26 = arith.constant 0 : index
    %c0_27 = arith.constant 0 : index
    %37 = vector.load %arg20[%c0_25, %c0_26, %c0_27] : memref<2x2x32xf32, #tpu.memory_space<vmem>>, vector<1x2x32xf32>
    %38 = vector.shape_cast %37 : vector<1x2x32xf32> to vector<2x32xf32>
    %39 = vector.extract_strided_slice %33 {offsets = [0, 0], sizes = [2, 128], strides = [1, 1]} : vector<16x128xf32> to vector<2x128xf32>
    %cst_28 = arith.constant dense<0.000000e+00> : vector<2x128xf32>
    %40 = tpu.matmul %36, %34, %cst_28 {dimension_numbers = #tpu.dot_dimension_numbers<[1], [0], [0], [1], [0, 0, 1, 1], [], []>} : vector<2x32xf32>, vector<32x128xf32>, vector<2x128xf32> -> vector<2x128xf32>
    %41 = arith.addf %39, %40 : vector<2x128xf32>
    %42 = math.tanh %41 : vector<2x128xf32>
    %43 = arith.negf %41 : vector<2x128xf32>
    %44 = math.exp %43 : vector<2x128xf32>
    %cst_29 = arith.constant 1.000000e+00 : f32
    %45 = vector.broadcast %cst_29 : f32 to vector<2x128xf32>
    %46 = arith.addf %45, %44 : vector<2x128xf32>
    %47 = arith.divf %45, %46 : vector<2x128xf32>
    %48 = arith.select %28, %42, %47 : vector<2x128xi1>, vector<2x128xf32>
    %49 = vector.extract_strided_slice %48 {offsets = [0, 0], sizes = [2, 32], strides = [1, 1]} : vector<2x128xf32> to vector<2x32xf32>
    %50 = vector.extract_strided_slice %48 {offsets = [0, 32], sizes = [2, 32], strides = [1, 1]} : vector<2x128xf32> to vector<2x32xf32>
    %51 = vector.extract_strided_slice %48 {offsets = [0, 64], sizes = [2, 32], strides = [1, 1]} : vector<2x128xf32> to vector<2x32xf32>
    %52 = vector.extract_strided_slice %48 {offsets = [0, 96], sizes = [2, 32], strides = [1, 1]} : vector<2x128xf32> to vector<2x32xf32>
    %53 = arith.mulf %50, %38 : vector<2x32xf32>
    %54 = arith.mulf %49, %51 : vector<2x32xf32>
    %55 = arith.addf %53, %54 : vector<2x32xf32>
    %56 = math.tanh %55 : vector<2x32xf32>
    %57 = arith.mulf %52, %56 : vector<2x32xf32>
    %c0_30 = arith.constant 0 : index
    %c0_31 = arith.constant 0 : index
    %58 = vector.load %arg21[%c0_30, %c0_31] : memref<16x32xf32, #tpu.memory_space<vmem>>, vector<2x32xf32>
    tpu.vector_store %arg21[%c0_30, %c0_31], %57 {strides = array<i32>} : memref<16x32xf32, #tpu.memory_space<vmem>>, vector<2x32xf32>,
    %59 = vector.extract_strided_slice %33 {offsets = [2, 0], sizes = [2, 128], strides = [1, 1]} : vector<16x128xf32> to vector<2x128xf32>
    %cst_32 = arith.constant dense<0.000000e+00> : vector<2x128xf32>
    %60 = tpu.matmul %57, %34, %cst_32 {dimension_numbers = #tpu.dot_dimension_numbers<[1], [0], [0], [1], [0, 0, 1, 1], [], []>} : vector<2x32xf32>, vector<32x128xf32>, vector<2x128xf32> -> vector<2x128xf32>
    %61 = arith.addf %59, %60 : vector<2x128xf32>
    %62 = math.tanh %61 : vector<2x128xf32>
    %63 = arith.negf %61 : vector<2x128xf32>
    %64 = math.exp %63 : vector<2x128xf32>
    %cst_33 = arith.constant 1.000000e+00 : f32
    %65 = vector.broadcast %cst_33 : f32 to vector<2x128xf32>
    %66 = arith.addf %65, %64 : vector<2x128xf32>
    %67 = arith.divf %65, %66 : vector<2x128xf32>
    %68 = arith.select %28, %62, %67 : vector<2x128xi1>, vector<2x128xf32>
    %69 = vector.extract_strided_slice %68 {offsets = [0, 0], sizes = [2, 32], strides = [1, 1]} : vector<2x128xf32> to vector<2x32xf32>
    %70 = vector.extract_strided_slice %68 {offsets = [0, 32], sizes = [2, 32], strides = [1, 1]} : vector<2x128xf32> to vector<2x32xf32>
    %71 = vector.extract_strided_slice %68 {offsets = [0, 64], sizes = [2, 32], strides = [1, 1]} : vector<2x128xf32> to vector<2x32xf32>
    %72 = vector.extract_strided_slice %68 {offsets = [0, 96], sizes = [2, 32], strides = [1, 1]} : vector<2x128xf32> to vector<2x32xf32>
    %73 = arith.mulf %70, %55 : vector<2x32xf32>
    %74 = arith.mulf %69, %71 : vector<2x32xf32>
    %75 = arith.addf %73, %74 : vector<2x32xf32>
    %76 = math.tanh %75 : vector<2x32xf32>
    %77 = arith.mulf %72, %76 : vector<2x32xf32>
    %c2 = arith.constant 2 : index
    %c0_34 = arith.constant 0 : index
    %78 = vector.load %arg21[%c2, %c0_34] : memref<16x32xf32, #tpu.memory_space<vmem>>, vector<2x32xf32>
    tpu.vector_store %arg21[%c2, %c0_34], %77 {strides = array<i32>} : memref<16x32xf32, #tpu.memory_space<vmem>>, vector<2x32xf32>,
    %79 = vector.extract_strided_slice %33 {offsets = [4, 0], sizes = [2, 128], strides = [1, 1]} : vector<16x128xf32> to vector<2x128xf32>
    %cst_35 = arith.constant dense<0.000000e+00> : vector<2x128xf32>
    %80 = tpu.matmul %77, %34, %cst_35 {dimension_numbers = #tpu.dot_dimension_numbers<[1], [0], [0], [1], [0, 0, 1, 1], [], []>} : vector<2x32xf32>, vector<32x128xf32>, vector<2x128xf32> -> vector<2x128xf32>
    %81 = arith.addf %79, %80 : vector<2x128xf32>
    %82 = math.tanh %81 : vector<2x128xf32>
    %83 = arith.negf %81 : vector<2x128xf32>
    %84 = math.exp %83 : vector<2x128xf32>
    %cst_36 = arith.constant 1.000000e+00 : f32
    %85 = vector.broadcast %cst_36 : f32 to vector<2x128xf32>
    %86 = arith.addf %85, %84 : vector<2x128xf32>
    %87 = arith.divf %85, %86 : vector<2x128xf32>
    %88 = arith.select %28, %82, %87 : vector<2x128xi1>, vector<2x128xf32>
    %89 = vector.extract_strided_slice %88 {offsets = [0, 0], sizes = [2, 32], strides = [1, 1]} : vector<2x128xf32> to vector<2x32xf32>
    %90 = vector.extract_strided_slice %88 {offsets = [0, 32], sizes = [2, 32], strides = [1, 1]} : vector<2x128xf32> to vector<2x32xf32>
    %91 = vector.extract_strided_slice %88 {offsets = [0, 64], sizes = [2, 32], strides = [1, 1]} : vector<2x128xf32> to vector<2x32xf32>
    %92 = vector.extract_strided_slice %88 {offsets = [0, 96], sizes = [2, 32], strides = [1, 1]} : vector<2x128xf32> to vector<2x32xf32>
    %93 = arith.mulf %90, %75 : vector<2x32xf32>
    %94 = arith.mulf %89, %91 : vector<2x32xf32>
    %95 = arith.addf %93, %94 : vector<2x32xf32>
    %96 = math.tanh %95 : vector<2x32xf32>
    %97 = arith.mulf %92, %96 : vector<2x32xf32>
    %c4 = arith.constant 4 : index
    %c0_37 = arith.constant 0 : index
    %98 = vector.load %arg21[%c4, %c0_37] : memref<16x32xf32, #tpu.memory_space<vmem>>, vector<2x32xf32>
    tpu.vector_store %arg21[%c4, %c0_37], %97 {strides = array<i32>} : memref<16x32xf32, #tpu.memory_space<vmem>>, vector<2x32xf32>,
    %99 = vector.extract_strided_slice %33 {offsets = [6, 0], sizes = [2, 128], strides = [1, 1]} : vector<16x128xf32> to vector<2x128xf32>
    %cst_38 = arith.constant dense<0.000000e+00> : vector<2x128xf32>
    %100 = tpu.matmul %97, %34, %cst_38 {dimension_numbers = #tpu.dot_dimension_numbers<[1], [0], [0], [1], [0, 0, 1, 1], [], []>} : vector<2x32xf32>, vector<32x128xf32>, vector<2x128xf32> -> vector<2x128xf32>
    %101 = arith.addf %99, %100 : vector<2x128xf32>
    %102 = math.tanh %101 : vector<2x128xf32>
    %103 = arith.negf %101 : vector<2x128xf32>
    %104 = math.exp %103 : vector<2x128xf32>
    %cst_39 = arith.constant 1.000000e+00 : f32
    %105 = vector.broadcast %cst_39 : f32 to vector<2x128xf32>
    %106 = arith.addf %105, %104 : vector<2x128xf32>
    %107 = arith.divf %105, %106 : vector<2x128xf32>
    %108 = arith.select %28, %102, %107 : vector<2x128xi1>, vector<2x128xf32>
    %109 = vector.extract_strided_slice %108 {offsets = [0, 0], sizes = [2, 32], strides = [1, 1]} : vector<2x128xf32> to vector<2x32xf32>
    %110 = vector.extract_strided_slice %108 {offsets = [0, 32], sizes = [2, 32], strides = [1, 1]} : vector<2x128xf32> to vector<2x32xf32>
    %111 = vector.extract_strided_slice %108 {offsets = [0, 64], sizes = [2, 32], strides = [1, 1]} : vector<2x128xf32> to vector<2x32xf32>
    %112 = vector.extract_strided_slice %108 {offsets = [0, 96], sizes = [2, 32], strides = [1, 1]} : vector<2x128xf32> to vector<2x32xf32>
    %113 = arith.mulf %110, %95 : vector<2x32xf32>
    %114 = arith.mulf %109, %111 : vector<2x32xf32>
    %115 = arith.addf %113, %114 : vector<2x32xf32>
    %116 = math.tanh %115 : vector<2x32xf32>
    %117 = arith.mulf %112, %116 : vector<2x32xf32>
    %c6 = arith.constant 6 : index
    %c0_40 = arith.constant 0 : index
    %118 = vector.load %arg21[%c6, %c0_40] : memref<16x32xf32, #tpu.memory_space<vmem>>, vector<2x32xf32>
    tpu.vector_store %arg21[%c6, %c0_40], %117 {strides = array<i32>} : memref<16x32xf32, #tpu.memory_space<vmem>>, vector<2x32xf32>,
    %119 = vector.extract_strided_slice %33 {offsets = [8, 0], sizes = [2, 128], strides = [1, 1]} : vector<16x128xf32> to vector<2x128xf32>
    %cst_41 = arith.constant dense<0.000000e+00> : vector<2x128xf32>
    %120 = tpu.matmul %117, %34, %cst_41 {dimension_numbers = #tpu.dot_dimension_numbers<[1], [0], [0], [1], [0, 0, 1, 1], [], []>} : vector<2x32xf32>, vector<32x128xf32>, vector<2x128xf32> -> vector<2x128xf32>
    %121 = arith.addf %119, %120 : vector<2x128xf32>
    %122 = math.tanh %121 : vector<2x128xf32>
    %123 = arith.negf %121 : vector<2x128xf32>
    %124 = math.exp %123 : vector<2x128xf32>
    %cst_42 = arith.constant 1.000000e+00 : f32
    %125 = vector.broadcast %cst_42 : f32 to vector<2x128xf32>
    %126 = arith.addf %125, %124 : vector<2x128xf32>
    %127 = arith.divf %125, %126 : vector<2x128xf32>
    %128 = arith.select %28, %122, %127 : vector<2x128xi1>, vector<2x128xf32>
    %129 = vector.extract_strided_slice %128 {offsets = [0, 0], sizes = [2, 32], strides = [1, 1]} : vector<2x128xf32> to vector<2x32xf32>
    %130 = vector.extract_strided_slice %128 {offsets = [0, 32], sizes = [2, 32], strides = [1, 1]} : vector<2x128xf32> to vector<2x32xf32>
    %131 = vector.extract_strided_slice %128 {offsets = [0, 64], sizes = [2, 32], strides = [1, 1]} : vector<2x128xf32> to vector<2x32xf32>
    %132 = vector.extract_strided_slice %128 {offsets = [0, 96], sizes = [2, 32], strides = [1, 1]} : vector<2x128xf32> to vector<2x32xf32>
    %133 = arith.mulf %130, %115 : vector<2x32xf32>
    %134 = arith.mulf %129, %131 : vector<2x32xf32>
    %135 = arith.addf %133, %134 : vector<2x32xf32>
    %136 = math.tanh %135 : vector<2x32xf32>
    %137 = arith.mulf %132, %136 : vector<2x32xf32>
    %c8 = arith.constant 8 : index
    %c0_43 = arith.constant 0 : index
    %138 = vector.load %arg21[%c8, %c0_43] : memref<16x32xf32, #tpu.memory_space<vmem>>, vector<2x32xf32>
    tpu.vector_store %arg21[%c8, %c0_43], %137 {strides = array<i32>} : memref<16x32xf32, #tpu.memory_space<vmem>>, vector<2x32xf32>,
    %139 = vector.extract_strided_slice %33 {offsets = [10, 0], sizes = [2, 128], strides = [1, 1]} : vector<16x128xf32> to vector<2x128xf32>
    %cst_44 = arith.constant dense<0.000000e+00> : vector<2x128xf32>
    %140 = tpu.matmul %137, %34, %cst_44 {dimension_numbers = #tpu.dot_dimension_numbers<[1], [0], [0], [1], [0, 0, 1, 1], [], []>} : vector<2x32xf32>, vector<32x128xf32>, vector<2x128xf32> -> vector<2x128xf32>
    %141 = arith.addf %139, %140 : vector<2x128xf32>
    %142 = math.tanh %141 : vector<2x128xf32>
    %143 = arith.negf %141 : vector<2x128xf32>
    %144 = math.exp %143 : vector<2x128xf32>
    %cst_45 = arith.constant 1.000000e+00 : f32
    %145 = vector.broadcast %cst_45 : f32 to vector<2x128xf32>
    %146 = arith.addf %145, %144 : vector<2x128xf32>
    %147 = arith.divf %145, %146 : vector<2x128xf32>
    %148 = arith.select %28, %142, %147 : vector<2x128xi1>, vector<2x128xf32>
    %149 = vector.extract_strided_slice %148 {offsets = [0, 0], sizes = [2, 32], strides = [1, 1]} : vector<2x128xf32> to vector<2x32xf32>
    %150 = vector.extract_strided_slice %148 {offsets = [0, 32], sizes = [2, 32], strides = [1, 1]} : vector<2x128xf32> to vector<2x32xf32>
    %151 = vector.extract_strided_slice %148 {offsets = [0, 64], sizes = [2, 32], strides = [1, 1]} : vector<2x128xf32> to vector<2x32xf32>
    %152 = vector.extract_strided_slice %148 {offsets = [0, 96], sizes = [2, 32], strides = [1, 1]} : vector<2x128xf32> to vector<2x32xf32>
    %153 = arith.mulf %150, %135 : vector<2x32xf32>
    %154 = arith.mulf %149, %151 : vector<2x32xf32>
    %155 = arith.addf %153, %154 : vector<2x32xf32>
    %156 = math.tanh %155 : vector<2x32xf32>
    %157 = arith.mulf %152, %156 : vector<2x32xf32>
    %c10 = arith.constant 10 : index
    %c0_46 = arith.constant 0 : index
    %158 = vector.load %arg21[%c10, %c0_46] : memref<16x32xf32, #tpu.memory_space<vmem>>, vector<2x32xf32>
    tpu.vector_store %arg21[%c10, %c0_46], %157 {strides = array<i32>} : memref<16x32xf32, #tpu.memory_space<vmem>>, vector<2x32xf32>,
    %159 = vector.extract_strided_slice %33 {offsets = [12, 0], sizes = [2, 128], strides = [1, 1]} : vector<16x128xf32> to vector<2x128xf32>
    %cst_47 = arith.constant dense<0.000000e+00> : vector<2x128xf32>
    %160 = tpu.matmul %157, %34, %cst_47 {dimension_numbers = #tpu.dot_dimension_numbers<[1], [0], [0], [1], [0, 0, 1, 1], [], []>} : vector<2x32xf32>, vector<32x128xf32>, vector<2x128xf32> -> vector<2x128xf32>
    %161 = arith.addf %159, %160 : vector<2x128xf32>
    %162 = math.tanh %161 : vector<2x128xf32>
    %163 = arith.negf %161 : vector<2x128xf32>
    %164 = math.exp %163 : vector<2x128xf32>
    %cst_48 = arith.constant 1.000000e+00 : f32
    %165 = vector.broadcast %cst_48 : f32 to vector<2x128xf32>
    %166 = arith.addf %165, %164 : vector<2x128xf32>
    %167 = arith.divf %165, %166 : vector<2x128xf32>
    %168 = arith.select %28, %162, %167 : vector<2x128xi1>, vector<2x128xf32>
    %169 = vector.extract_strided_slice %168 {offsets = [0, 0], sizes = [2, 32], strides = [1, 1]} : vector<2x128xf32> to vector<2x32xf32>
    %170 = vector.extract_strided_slice %168 {offsets = [0, 32], sizes = [2, 32], strides = [1, 1]} : vector<2x128xf32> to vector<2x32xf32>
    %171 = vector.extract_strided_slice %168 {offsets = [0, 64], sizes = [2, 32], strides = [1, 1]} : vector<2x128xf32> to vector<2x32xf32>
    %172 = vector.extract_strided_slice %168 {offsets = [0, 96], sizes = [2, 32], strides = [1, 1]} : vector<2x128xf32> to vector<2x32xf32>
    %173 = arith.mulf %170, %155 : vector<2x32xf32>
    %174 = arith.mulf %169, %171 : vector<2x32xf32>
    %175 = arith.addf %173, %174 : vector<2x32xf32>
    %176 = math.tanh %175 : vector<2x32xf32>
    %177 = arith.mulf %172, %176 : vector<2x32xf32>
    %c12 = arith.constant 12 : index
    %c0_49 = arith.constant 0 : index
    %178 = vector.load %arg21[%c12, %c0_49] : memref<16x32xf32, #tpu.memory_space<vmem>>, vector<2x32xf32>
    tpu.vector_store %arg21[%c12, %c0_49], %177 {strides = array<i32>} : memref<16x32xf32, #tpu.memory_space<vmem>>, vector<2x32xf32>,
    %179 = vector.extract_strided_slice %33 {offsets = [14, 0], sizes = [2, 128], strides = [1, 1]} : vector<16x128xf32> to vector<2x128xf32>
    %cst_50 = arith.constant dense<0.000000e+00> : vector<2x128xf32>
    %180 = tpu.matmul %177, %34, %cst_50 {dimension_numbers = #tpu.dot_dimension_numbers<[1], [0], [0], [1], [0, 0, 1, 1], [], []>} : vector<2x32xf32>, vector<32x128xf32>, vector<2x128xf32> -> vector<2x128xf32>
    %181 = arith.addf %179, %180 : vector<2x128xf32>
    %182 = math.tanh %181 : vector<2x128xf32>
    %183 = arith.negf %181 : vector<2x128xf32>
    %184 = math.exp %183 : vector<2x128xf32>
    %cst_51 = arith.constant 1.000000e+00 : f32
    %185 = vector.broadcast %cst_51 : f32 to vector<2x128xf32>
    %186 = arith.addf %185, %184 : vector<2x128xf32>
    %187 = arith.divf %185, %186 : vector<2x128xf32>
    %188 = arith.select %28, %182, %187 : vector<2x128xi1>, vector<2x128xf32>
    %189 = vector.extract_strided_slice %188 {offsets = [0, 0], sizes = [2, 32], strides = [1, 1]} : vector<2x128xf32> to vector<2x32xf32>
    %190 = vector.extract_strided_slice %188 {offsets = [0, 32], sizes = [2, 32], strides = [1, 1]} : vector<2x128xf32> to vector<2x32xf32>
    %191 = vector.extract_strided_slice %188 {offsets = [0, 64], sizes = [2, 32], strides = [1, 1]} : vector<2x128xf32> to vector<2x32xf32>
    %192 = vector.extract_strided_slice %188 {offsets = [0, 96], sizes = [2, 32], strides = [1, 1]} : vector<2x128xf32> to vector<2x32xf32>
    %193 = arith.mulf %190, %175 : vector<2x32xf32>
    %194 = arith.mulf %189, %191 : vector<2x32xf32>
    %195 = arith.addf %193, %194 : vector<2x32xf32>
    %196 = math.tanh %195 : vector<2x32xf32>
    %197 = arith.mulf %192, %196 : vector<2x32xf32>
    %c14 = arith.constant 14 : index
    %c0_52 = arith.constant 0 : index
    %198 = vector.load %arg21[%c14, %c0_52] : memref<16x32xf32, #tpu.memory_space<vmem>>, vector<2x32xf32>
    tpu.vector_store %arg21[%c14, %c0_52], %197 {strides = array<i32>} : memref<16x32xf32, #tpu.memory_space<vmem>>, vector<2x32xf32>,
    %c0_53 = arith.constant 0 : index
    %c0_54 = arith.constant 0 : index
    %c0_55 = arith.constant 0 : index
    %199 = vector.load %arg19[%c0_53, %c0_54, %c0_55] : memref<2x2x32xf32, #tpu.memory_space<vmem>>, vector<1x2x32xf32>
    %200 = vector.shape_cast %199 : vector<1x2x32xf32> to vector<2x32xf32>
    %201 = vector.shape_cast %197 : vector<2x32xf32> to vector<1x2x32xf32>
    tpu.vector_store %arg19[%c0_53, %c0_54, %c0_55], %201 {strides = array<i32>} : memref<2x2x32xf32, #tpu.memory_space<vmem>>, vector<1x2x32xf32>,
    %c0_56 = arith.constant 0 : index
    %c0_57 = arith.constant 0 : index
    %c0_58 = arith.constant 0 : index
    %202 = vector.load %arg20[%c0_56, %c0_57, %c0_58] : memref<2x2x32xf32, #tpu.memory_space<vmem>>, vector<1x2x32xf32>
    %203 = vector.shape_cast %202 : vector<1x2x32xf32> to vector<2x32xf32>
    %204 = vector.shape_cast %195 : vector<2x32xf32> to vector<1x2x32xf32>
    tpu.vector_store %arg20[%c0_56, %c0_57, %c0_58], %204 {strides = array<i32>} : memref<2x2x32xf32, #tpu.memory_space<vmem>>, vector<1x2x32xf32>,
    %c0_59 = arith.constant 0 : index
    %c0_60 = arith.constant 0 : index
    %205 = vector.load %arg21[%c0_59, %c0_60] : memref<16x32xf32, #tpu.memory_space<vmem>>, vector<16x32xf32>
    %c0_61 = arith.constant 0 : index
    %c0_62 = arith.constant 0 : index
    %206 = vector.load %arg13[%c0_61, %c0_62] : memref<32x128xf32, #tpu.memory_space<vmem>>, vector<32x128xf32>
    %cst_63 = arith.constant dense<0.000000e+00> : vector<16x128xf32>
    %207 = tpu.matmul %205, %206, %cst_63 {dimension_numbers = #tpu.dot_dimension_numbers<[1], [0], [0], [1], [0, 0, 1, 1], [], []>} : vector<16x32xf32>, vector<32x128xf32>, vector<16x128xf32> -> vector<16x128xf32>
    %c0_64 = arith.constant 0 : index
    %c0_65 = arith.constant 0 : index
    %208 = vector.load %arg15[%c0_64, %c0_65] : memref<1x128xf32, #tpu.memory_space<vmem>>, vector<1x128xf32>
    %209 = vector.broadcast %208 : vector<1x128xf32> to vector<16x128xf32>
    %210 = arith.addf %207, %209 : vector<16x128xf32>
    %c0_66 = arith.constant 0 : index
    %c0_67 = arith.constant 0 : index
    %211 = vector.load %arg14[%c0_66, %c0_67] : memref<32x128xf32, #tpu.memory_space<vmem>>, vector<32x128xf32>
    %c1 = arith.constant 1 : index
    %c0_68 = arith.constant 0 : index
    %c0_69 = arith.constant 0 : index
    %212 = vector.load %arg19[%c1, %c0_68, %c0_69] : memref<2x2x32xf32, #tpu.memory_space<vmem>>, vector<1x2x32xf32>
    %213 = vector.shape_cast %212 : vector<1x2x32xf32> to vector<2x32xf32>
    %c1_70 = arith.constant 1 : index
    %c0_71 = arith.constant 0 : index
    %c0_72 = arith.constant 0 : index
    %214 = vector.load %arg20[%c1_70, %c0_71, %c0_72] : memref<2x2x32xf32, #tpu.memory_space<vmem>>, vector<1x2x32xf32>
    %215 = vector.shape_cast %214 : vector<1x2x32xf32> to vector<2x32xf32>
    %216 = vector.extract_strided_slice %210 {offsets = [0, 0], sizes = [2, 128], strides = [1, 1]} : vector<16x128xf32> to vector<2x128xf32>
    %cst_73 = arith.constant dense<0.000000e+00> : vector<2x128xf32>
    %217 = tpu.matmul %213, %211, %cst_73 {dimension_numbers = #tpu.dot_dimension_numbers<[1], [0], [0], [1], [0, 0, 1, 1], [], []>} : vector<2x32xf32>, vector<32x128xf32>, vector<2x128xf32> -> vector<2x128xf32>
    %218 = arith.addf %216, %217 : vector<2x128xf32>
    %219 = math.tanh %218 : vector<2x128xf32>
    %220 = arith.negf %218 : vector<2x128xf32>
    %221 = math.exp %220 : vector<2x128xf32>
    %cst_74 = arith.constant 1.000000e+00 : f32
    %222 = vector.broadcast %cst_74 : f32 to vector<2x128xf32>
    %223 = arith.addf %222, %221 : vector<2x128xf32>
    %224 = arith.divf %222, %223 : vector<2x128xf32>
    %225 = arith.select %28, %219, %224 : vector<2x128xi1>, vector<2x128xf32>
    %226 = vector.extract_strided_slice %225 {offsets = [0, 0], sizes = [2, 32], strides = [1, 1]} : vector<2x128xf32> to vector<2x32xf32>
    %227 = vector.extract_strided_slice %225 {offsets = [0, 32], sizes = [2, 32], strides = [1, 1]} : vector<2x128xf32> to vector<2x32xf32>
    %228 = vector.extract_strided_slice %225 {offsets = [0, 64], sizes = [2, 32], strides = [1, 1]} : vector<2x128xf32> to vector<2x32xf32>
    %229 = vector.extract_strided_slice %225 {offsets = [0, 96], sizes = [2, 32], strides = [1, 1]} : vector<2x128xf32> to vector<2x32xf32>
    %230 = arith.mulf %227, %215 : vector<2x32xf32>
    %231 = arith.mulf %226, %228 : vector<2x32xf32>
    %232 = arith.addf %230, %231 : vector<2x32xf32>
    %233 = math.tanh %232 : vector<2x32xf32>
    %234 = arith.mulf %229, %233 : vector<2x32xf32>
    %235 = vector.extract_strided_slice %210 {offsets = [2, 0], sizes = [2, 128], strides = [1, 1]} : vector<16x128xf32> to vector<2x128xf32>
    %cst_75 = arith.constant dense<0.000000e+00> : vector<2x128xf32>
    %236 = tpu.matmul %234, %211, %cst_75 {dimension_numbers = #tpu.dot_dimension_numbers<[1], [0], [0], [1], [0, 0, 1, 1], [], []>} : vector<2x32xf32>, vector<32x128xf32>, vector<2x128xf32> -> vector<2x128xf32>
    %237 = arith.addf %235, %236 : vector<2x128xf32>
    %238 = math.tanh %237 : vector<2x128xf32>
    %239 = arith.negf %237 : vector<2x128xf32>
    %240 = math.exp %239 : vector<2x128xf32>
    %cst_76 = arith.constant 1.000000e+00 : f32
    %241 = vector.broadcast %cst_76 : f32 to vector<2x128xf32>
    %242 = arith.addf %241, %240 : vector<2x128xf32>
    %243 = arith.divf %241, %242 : vector<2x128xf32>
    %244 = arith.select %28, %238, %243 : vector<2x128xi1>, vector<2x128xf32>
    %245 = vector.extract_strided_slice %244 {offsets = [0, 0], sizes = [2, 32], strides = [1, 1]} : vector<2x128xf32> to vector<2x32xf32>
    %246 = vector.extract_strided_slice %244 {offsets = [0, 32], sizes = [2, 32], strides = [1, 1]} : vector<2x128xf32> to vector<2x32xf32>
    %247 = vector.extract_strided_slice %244 {offsets = [0, 64], sizes = [2, 32], strides = [1, 1]} : vector<2x128xf32> to vector<2x32xf32>
    %248 = vector.extract_strided_slice %244 {offsets = [0, 96], sizes = [2, 32], strides = [1, 1]} : vector<2x128xf32> to vector<2x32xf32>
    %249 = arith.mulf %246, %232 : vector<2x32xf32>
    %250 = arith.mulf %245, %247 : vector<2x32xf32>
    %251 = arith.addf %249, %250 : vector<2x32xf32>
    %252 = math.tanh %251 : vector<2x32xf32>
    %253 = arith.mulf %248, %252 : vector<2x32xf32>
    %254 = vector.extract_strided_slice %210 {offsets = [4, 0], sizes = [2, 128], strides = [1, 1]} : vector<16x128xf32> to vector<2x128xf32>
    %cst_77 = arith.constant dense<0.000000e+00> : vector<2x128xf32>
    %255 = tpu.matmul %253, %211, %cst_77 {dimension_numbers = #tpu.dot_dimension_numbers<[1], [0], [0], [1], [0, 0, 1, 1], [], []>} : vector<2x32xf32>, vector<32x128xf32>, vector<2x128xf32> -> vector<2x128xf32>
    %256 = arith.addf %254, %255 : vector<2x128xf32>
    %257 = math.tanh %256 : vector<2x128xf32>
    %258 = arith.negf %256 : vector<2x128xf32>
    %259 = math.exp %258 : vector<2x128xf32>
    %cst_78 = arith.constant 1.000000e+00 : f32
    %260 = vector.broadcast %cst_78 : f32 to vector<2x128xf32>
    %261 = arith.addf %260, %259 : vector<2x128xf32>
    %262 = arith.divf %260, %261 : vector<2x128xf32>
    %263 = arith.select %28, %257, %262 : vector<2x128xi1>, vector<2x128xf32>
    %264 = vector.extract_strided_slice %263 {offsets = [0, 0], sizes = [2, 32], strides = [1, 1]} : vector<2x128xf32> to vector<2x32xf32>
    %265 = vector.extract_strided_slice %263 {offsets = [0, 32], sizes = [2, 32], strides = [1, 1]} : vector<2x128xf32> to vector<2x32xf32>
    %266 = vector.extract_strided_slice %263 {offsets = [0, 64], sizes = [2, 32], strides = [1, 1]} : vector<2x128xf32> to vector<2x32xf32>
    %267 = vector.extract_strided_slice %263 {offsets = [0, 96], sizes = [2, 32], strides = [1, 1]} : vector<2x128xf32> to vector<2x32xf32>
    %268 = arith.mulf %265, %251 : vector<2x32xf32>
    %269 = arith.mulf %264, %266 : vector<2x32xf32>
    %270 = arith.addf %268, %269 : vector<2x32xf32>
    %271 = math.tanh %270 : vector<2x32xf32>
    %272 = arith.mulf %267, %271 : vector<2x32xf32>
    %273 = vector.extract_strided_slice %210 {offsets = [6, 0], sizes = [2, 128], strides = [1, 1]} : vector<16x128xf32> to vector<2x128xf32>
    %cst_79 = arith.constant dense<0.000000e+00> : vector<2x128xf32>
    %274 = tpu.matmul %272, %211, %cst_79 {dimension_numbers = #tpu.dot_dimension_numbers<[1], [0], [0], [1], [0, 0, 1, 1], [], []>} : vector<2x32xf32>, vector<32x128xf32>, vector<2x128xf32> -> vector<2x128xf32>
    %275 = arith.addf %273, %274 : vector<2x128xf32>
    %276 = math.tanh %275 : vector<2x128xf32>
    %277 = arith.negf %275 : vector<2x128xf32>
    %278 = math.exp %277 : vector<2x128xf32>
    %cst_80 = arith.constant 1.000000e+00 : f32
    %279 = vector.broadcast %cst_80 : f32 to vector<2x128xf32>
    %280 = arith.addf %279, %278 : vector<2x128xf32>
    %281 = arith.divf %279, %280 : vector<2x128xf32>
    %282 = arith.select %28, %276, %281 : vector<2x128xi1>, vector<2x128xf32>
    %283 = vector.extract_strided_slice %282 {offsets = [0, 0], sizes = [2, 32], strides = [1, 1]} : vector<2x128xf32> to vector<2x32xf32>
    %284 = vector.extract_strided_slice %282 {offsets = [0, 32], sizes = [2, 32], strides = [1, 1]} : vector<2x128xf32> to vector<2x32xf32>
    %285 = vector.extract_strided_slice %282 {offsets = [0, 64], sizes = [2, 32], strides = [1, 1]} : vector<2x128xf32> to vector<2x32xf32>
    %286 = vector.extract_strided_slice %282 {offsets = [0, 96], sizes = [2, 32], strides = [1, 1]} : vector<2x128xf32> to vector<2x32xf32>
    %287 = arith.mulf %284, %270 : vector<2x32xf32>
    %288 = arith.mulf %283, %285 : vector<2x32xf32>
    %289 = arith.addf %287, %288 : vector<2x32xf32>
    %290 = math.tanh %289 : vector<2x32xf32>
    %291 = arith.mulf %286, %290 : vector<2x32xf32>
    %292 = vector.extract_strided_slice %210 {offsets = [8, 0], sizes = [2, 128], strides = [1, 1]} : vector<16x128xf32> to vector<2x128xf32>
    %cst_81 = arith.constant dense<0.000000e+00> : vector<2x128xf32>
    %293 = tpu.matmul %291, %211, %cst_81 {dimension_numbers = #tpu.dot_dimension_numbers<[1], [0], [0], [1], [0, 0, 1, 1], [], []>} : vector<2x32xf32>, vector<32x128xf32>, vector<2x128xf32> -> vector<2x128xf32>
    %294 = arith.addf %292, %293 : vector<2x128xf32>
    %295 = math.tanh %294 : vector<2x128xf32>
    %296 = arith.negf %294 : vector<2x128xf32>
    %297 = math.exp %296 : vector<2x128xf32>
    %cst_82 = arith.constant 1.000000e+00 : f32
    %298 = vector.broadcast %cst_82 : f32 to vector<2x128xf32>
    %299 = arith.addf %298, %297 : vector<2x128xf32>
    %300 = arith.divf %298, %299 : vector<2x128xf32>
    %301 = arith.select %28, %295, %300 : vector<2x128xi1>, vector<2x128xf32>
    %302 = vector.extract_strided_slice %301 {offsets = [0, 0], sizes = [2, 32], strides = [1, 1]} : vector<2x128xf32> to vector<2x32xf32>
    %303 = vector.extract_strided_slice %301 {offsets = [0, 32], sizes = [2, 32], strides = [1, 1]} : vector<2x128xf32> to vector<2x32xf32>
    %304 = vector.extract_strided_slice %301 {offsets = [0, 64], sizes = [2, 32], strides = [1, 1]} : vector<2x128xf32> to vector<2x32xf32>
    %305 = vector.extract_strided_slice %301 {offsets = [0, 96], sizes = [2, 32], strides = [1, 1]} : vector<2x128xf32> to vector<2x32xf32>
    %306 = arith.mulf %303, %289 : vector<2x32xf32>
    %307 = arith.mulf %302, %304 : vector<2x32xf32>
    %308 = arith.addf %306, %307 : vector<2x32xf32>
    %309 = math.tanh %308 : vector<2x32xf32>
    %310 = arith.mulf %305, %309 : vector<2x32xf32>
    %311 = vector.extract_strided_slice %210 {offsets = [10, 0], sizes = [2, 128], strides = [1, 1]} : vector<16x128xf32> to vector<2x128xf32>
    %cst_83 = arith.constant dense<0.000000e+00> : vector<2x128xf32>
    %312 = tpu.matmul %310, %211, %cst_83 {dimension_numbers = #tpu.dot_dimension_numbers<[1], [0], [0], [1], [0, 0, 1, 1], [], []>} : vector<2x32xf32>, vector<32x128xf32>, vector<2x128xf32> -> vector<2x128xf32>
    %313 = arith.addf %311, %312 : vector<2x128xf32>
    %314 = math.tanh %313 : vector<2x128xf32>
    %315 = arith.negf %313 : vector<2x128xf32>
    %316 = math.exp %315 : vector<2x128xf32>
    %cst_84 = arith.constant 1.000000e+00 : f32
    %317 = vector.broadcast %cst_84 : f32 to vector<2x128xf32>
    %318 = arith.addf %317, %316 : vector<2x128xf32>
    %319 = arith.divf %317, %318 : vector<2x128xf32>
    %320 = arith.select %28, %314, %319 : vector<2x128xi1>, vector<2x128xf32>
    %321 = vector.extract_strided_slice %320 {offsets = [0, 0], sizes = [2, 32], strides = [1, 1]} : vector<2x128xf32> to vector<2x32xf32>
    %322 = vector.extract_strided_slice %320 {offsets = [0, 32], sizes = [2, 32], strides = [1, 1]} : vector<2x128xf32> to vector<2x32xf32>
    %323 = vector.extract_strided_slice %320 {offsets = [0, 64], sizes = [2, 32], strides = [1, 1]} : vector<2x128xf32> to vector<2x32xf32>
    %324 = vector.extract_strided_slice %320 {offsets = [0, 96], sizes = [2, 32], strides = [1, 1]} : vector<2x128xf32> to vector<2x32xf32>
    %325 = arith.mulf %322, %308 : vector<2x32xf32>
    %326 = arith.mulf %321, %323 : vector<2x32xf32>
    %327 = arith.addf %325, %326 : vector<2x32xf32>
    %328 = math.tanh %327 : vector<2x32xf32>
    %329 = arith.mulf %324, %328 : vector<2x32xf32>
    %330 = vector.extract_strided_slice %210 {offsets = [12, 0], sizes = [2, 128], strides = [1, 1]} : vector<16x128xf32> to vector<2x128xf32>
    %cst_85 = arith.constant dense<0.000000e+00> : vector<2x128xf32>
    %331 = tpu.matmul %329, %211, %cst_85 {dimension_numbers = #tpu.dot_dimension_numbers<[1], [0], [0], [1], [0, 0, 1, 1], [], []>} : vector<2x32xf32>, vector<32x128xf32>, vector<2x128xf32> -> vector<2x128xf32>
    %332 = arith.addf %330, %331 : vector<2x128xf32>
    %333 = math.tanh %332 : vector<2x128xf32>
    %334 = arith.negf %332 : vector<2x128xf32>
    %335 = math.exp %334 : vector<2x128xf32>
    %cst_86 = arith.constant 1.000000e+00 : f32
    %336 = vector.broadcast %cst_86 : f32 to vector<2x128xf32>
    %337 = arith.addf %336, %335 : vector<2x128xf32>
    %338 = arith.divf %336, %337 : vector<2x128xf32>
    %339 = arith.select %28, %333, %338 : vector<2x128xi1>, vector<2x128xf32>
    %340 = vector.extract_strided_slice %339 {offsets = [0, 0], sizes = [2, 32], strides = [1, 1]} : vector<2x128xf32> to vector<2x32xf32>
    %341 = vector.extract_strided_slice %339 {offsets = [0, 32], sizes = [2, 32], strides = [1, 1]} : vector<2x128xf32> to vector<2x32xf32>
    %342 = vector.extract_strided_slice %339 {offsets = [0, 64], sizes = [2, 32], strides = [1, 1]} : vector<2x128xf32> to vector<2x32xf32>
    %343 = vector.extract_strided_slice %339 {offsets = [0, 96], sizes = [2, 32], strides = [1, 1]} : vector<2x128xf32> to vector<2x32xf32>
    %344 = arith.mulf %341, %327 : vector<2x32xf32>
    %345 = arith.mulf %340, %342 : vector<2x32xf32>
    %346 = arith.addf %344, %345 : vector<2x32xf32>
    %347 = math.tanh %346 : vector<2x32xf32>
    %348 = arith.mulf %343, %347 : vector<2x32xf32>
    %349 = vector.extract_strided_slice %210 {offsets = [14, 0], sizes = [2, 128], strides = [1, 1]} : vector<16x128xf32> to vector<2x128xf32>
    %cst_87 = arith.constant dense<0.000000e+00> : vector<2x128xf32>
    %350 = tpu.matmul %348, %211, %cst_87 {dimension_numbers = #tpu.dot_dimension_numbers<[1], [0], [0], [1], [0, 0, 1, 1], [], []>} : vector<2x32xf32>, vector<32x128xf32>, vector<2x128xf32> -> vector<2x128xf32>
    %351 = arith.addf %349, %350 : vector<2x128xf32>
    %352 = math.tanh %351 : vector<2x128xf32>
    %353 = arith.negf %351 : vector<2x128xf32>
    %354 = math.exp %353 : vector<2x128xf32>
    %cst_88 = arith.constant 1.000000e+00 : f32
    %355 = vector.broadcast %cst_88 : f32 to vector<2x128xf32>
    %356 = arith.addf %355, %354 : vector<2x128xf32>
    %357 = arith.divf %355, %356 : vector<2x128xf32>
    %358 = arith.select %28, %352, %357 : vector<2x128xi1>, vector<2x128xf32>
    %359 = vector.extract_strided_slice %358 {offsets = [0, 0], sizes = [2, 32], strides = [1, 1]} : vector<2x128xf32> to vector<2x32xf32>
    %360 = vector.extract_strided_slice %358 {offsets = [0, 32], sizes = [2, 32], strides = [1, 1]} : vector<2x128xf32> to vector<2x32xf32>
    %361 = vector.extract_strided_slice %358 {offsets = [0, 64], sizes = [2, 32], strides = [1, 1]} : vector<2x128xf32> to vector<2x32xf32>
    %362 = vector.extract_strided_slice %358 {offsets = [0, 96], sizes = [2, 32], strides = [1, 1]} : vector<2x128xf32> to vector<2x32xf32>
    %363 = arith.mulf %360, %346 : vector<2x32xf32>
    %364 = arith.mulf %359, %361 : vector<2x32xf32>
    %365 = arith.addf %363, %364 : vector<2x32xf32>
    %366 = math.tanh %365 : vector<2x32xf32>
    %367 = arith.mulf %362, %366 : vector<2x32xf32>
    %c1_89 = arith.constant 1 : index
    %c0_90 = arith.constant 0 : index
    %c0_91 = arith.constant 0 : index
    %368 = vector.load %arg19[%c1_89, %c0_90, %c0_91] : memref<2x2x32xf32, #tpu.memory_space<vmem>>, vector<1x2x32xf32>
    %369 = vector.shape_cast %368 : vector<1x2x32xf32> to vector<2x32xf32>
    %370 = vector.shape_cast %367 : vector<2x32xf32> to vector<1x2x32xf32>
    tpu.vector_store %arg19[%c1_89, %c0_90, %c0_91], %370 {strides = array<i32>} : memref<2x2x32xf32, #tpu.memory_space<vmem>>, vector<1x2x32xf32>,
    %c1_92 = arith.constant 1 : index
    %c0_93 = arith.constant 0 : index
    %c0_94 = arith.constant 0 : index
    %371 = vector.load %arg20[%c1_92, %c0_93, %c0_94] : memref<2x2x32xf32, #tpu.memory_space<vmem>>, vector<1x2x32xf32>
    %372 = vector.shape_cast %371 : vector<1x2x32xf32> to vector<2x32xf32>
    %373 = vector.shape_cast %365 : vector<2x32xf32> to vector<1x2x32xf32>
    tpu.vector_store %arg20[%c1_92, %c0_93, %c0_94], %373 {strides = array<i32>} : memref<2x2x32xf32, #tpu.memory_space<vmem>>, vector<1x2x32xf32>,
    %c0_i32_95 = arith.constant 0 : i32
    %374 = arith.cmpi eq, %arg0, %c0_i32_95 : i32
    %375 = arith.extui %374 : i1 to i32
    %c0_i32_96 = arith.constant 0 : i32
    %376 = arith.cmpi ne, %375, %c0_i32_96 : i32
    scf.if %376 {
      %c0_97 = arith.constant 0 : index
      %c0_98 = arith.constant 0 : index
      %377 = vector.load %arg16[%c0_97, %c0_98] : memref<32x2xf32, #tpu.memory_space<vmem>>, vector<32x2xf32>
      %cst_99 = arith.constant dense<0.000000e+00> : vector<2x2xf32>
      %378 = tpu.matmul %367, %377, %cst_99 {dimension_numbers = #tpu.dot_dimension_numbers<[1], [0], [0], [1], [0, 0, 1, 1], [], []>} : vector<2x32xf32>, vector<32x2xf32>, vector<2x2xf32> -> vector<2x2xf32>
      %c0_100 = arith.constant 0 : index
      %c0_101 = arith.constant 0 : index
      %379 = vector.load %arg17[%c0_100, %c0_101] : memref<1x2xf32, #tpu.memory_space<vmem>>, vector<1x2xf32>
      %380 = vector.broadcast %379 : vector<1x2xf32> to vector<2x2xf32>
      %381 = arith.addf %378, %380 : vector<2x2xf32>
      %382 = arith.negf %381 : vector<2x2xf32>
      %383 = math.exp %382 : vector<2x2xf32>
      %cst_102 = arith.constant 1.000000e+00 : f32
      %384 = vector.broadcast %cst_102 : f32 to vector<2x2xf32>
      %385 = arith.addf %384, %383 : vector<2x2xf32>
      %386 = arith.divf %384, %385 : vector<2x2xf32>
      %c0_103 = arith.constant 0 : index
      %c0_104 = arith.constant 0 : index
      %387 = vector.load %arg18[%c0_103, %c0_104] : memref<2x2xf32, #tpu.memory_space<vmem>>, vector<2x2xf32>
      tpu.vector_store %arg18[%c0_103, %c0_104], %386 {strides = array<i32>} : memref<2x2xf32, #tpu.memory_space<vmem>>, vector<2x2xf32>,
    } else {
    }
    return
  }
  func.func @transform_0(%arg0: i32) -> (i32, i32) {
    %c0_i32 = arith.constant 0 : i32
    %c0_i32_0 = arith.constant 0 : i32
    return %arg0, %c0_i32 : i32, i32
  }
  func.func @transform_1(%arg0: i32) -> (i32, i32) {
    %c0_i32 = arith.constant 0 : i32
    %c0_i32_0 = arith.constant 0 : i32
    %c0_i32_1 = arith.constant 0 : i32
    return %c0_i32, %c0_i32_0 : i32, i32
  }
  func.func @transform_2(%arg0: i32) -> (i32, i32) {
    %c0_i32 = arith.constant 0 : i32
    %c0_i32_0 = arith.constant 0 : i32
    %c0_i32_1 = arith.constant 0 : i32
    return %c0_i32, %c0_i32_0 : i32, i32
  }
  func.func @transform_3(%arg0: i32) -> (i32, i32) {
    %c0_i32 = arith.constant 0 : i32
    %c0_i32_0 = arith.constant 0 : i32
    %c0_i32_1 = arith.constant 0 : i32
    return %c0_i32, %c0_i32_0 : i32, i32
  }
  func.func @transform_4(%arg0: i32) -> (i32, i32) {
    %c0_i32 = arith.constant 0 : i32
    %c0_i32_0 = arith.constant 0 : i32
    %c0_i32_1 = arith.constant 0 : i32
    return %c0_i32, %c0_i32_0 : i32, i32
  }
  func.func @transform_5(%arg0: i32) -> (i32, i32) {
    %c0_i32 = arith.constant 0 : i32
    %c0_i32_0 = arith.constant 0 : i32
    %c0_i32_1 = arith.constant 0 : i32
    return %c0_i32, %c0_i32_0 : i32, i32
  }
  func.func @transform_6(%arg0: i32) -> (i32, i32) {
    %c0_i32 = arith.constant 0 : i32
    %c0_i32_0 = arith.constant 0 : i32
    %c0_i32_1 = arith.constant 0 : i32
    return %c0_i32, %c0_i32_0 : i32, i32
  }
  func.func @transform_7(%arg0: i32) -> (i32, i32, i32) {
    %c0_i32 = arith.constant 0 : i32
    %c0_i32_0 = arith.constant 0 : i32
    %c0_i32_1 = arith.constant 0 : i32
    %c0_i32_2 = arith.constant 0 : i32
    return %c0_i32, %c0_i32_0, %c0_i32_1 : i32, i32, i32
  }
  func.func @transform_8(%arg0: i32) -> (i32, i32, i32) {
    %c0_i32 = arith.constant 0 : i32
    %c0_i32_0 = arith.constant 0 : i32
    %c0_i32_1 = arith.constant 0 : i32
    %c0_i32_2 = arith.constant 0 : i32
    return %c0_i32, %c0_i32_0, %c0_i32_1 : i32, i32, i32
  }
  func.func @transform_9(%arg0: i32) -> (i32, i32) {
    %c0_i32 = arith.constant 0 : i32
    %c0_i32_0 = arith.constant 0 : i32
    %c0_i32_1 = arith.constant 0 : i32
    return %c0_i32, %c0_i32_0 : i32, i32
  }
  func.func @transform_10(%arg0: i32) -> (i32, i32) {
    %c0_i32 = arith.constant 0 : i32
    %c0_i32_0 = arith.constant 0 : i32
    %c0_i32_1 = arith.constant 0 : i32
    return %c0_i32, %c0_i32_0 : i32, i32
  }
  func.func @transform_11(%arg0: i32) -> (i32, i32) {
    %c0_i32 = arith.constant 0 : i32
    %c0_i32_0 = arith.constant 0 : i32
    %c0_i32_1 = arith.constant 0 : i32
    return %c0_i32, %c0_i32_0 : i32, i32
  }
  func.func @transform_12(%arg0: i32) -> (i32, i32) {
    %c0_i32 = arith.constant 0 : i32
    %c0_i32_0 = arith.constant 0 : i32
    %c0_i32_1 = arith.constant 0 : i32
    return %c0_i32, %c0_i32_0 : i32, i32
  }
  func.func @transform_13(%arg0: i32) -> (i32, i32) {
    %c0_i32 = arith.constant 0 : i32
    %c0_i32_0 = arith.constant 0 : i32
    %c0_i32_1 = arith.constant 0 : i32
    return %c0_i32, %c0_i32_0 : i32, i32
  }
  func.func @transform_14(%arg0: i32) -> (i32, i32) {
    %c0_i32 = arith.constant 0 : i32
    %c0_i32_0 = arith.constant 0 : i32
    %c0_i32_1 = arith.constant 0 : i32
    return %c0_i32, %c0_i32_0 : i32, i32
  }
  func.func @transform_15(%arg0: i32) -> (i32, i32) {
    %c0_i32 = arith.constant 0 : i32
    %c0_i32_0 = arith.constant 0 : i32
    %c0_i32_1 = arith.constant 0 : i32
    return %c0_i32, %c0_i32_0 : i32, i32
  }
  func.func @transform_16(%arg0: i32) -> (i32, i32) {
    %c0_i32 = arith.constant 0 : i32
    %c0_i32_0 = arith.constant 0 : i32
    %c0_i32_1 = arith.constant 0 : i32
    return %c0_i32, %c0_i32_0 : i32, i32
  }
  func.func @transform_17(%arg0: i32) -> (i32, i32) {
    %c0_i32 = arith.constant 0 : i32
    %c0_i32_0 = arith.constant 0 : i32
    %c0_i32_1 = arith.constant 0 : i32
    return %c0_i32, %c0_i32_0 : i32, i32
  }
}

</mosaic_0001>

<llo_original>
// kernel: tpu_custom_call.1
$region0: #{tpu_custom_call.1}
  #allocation0 [shape = 'u32[]', space=smem, size = 0x4, offset = 0x4, fixed_abs, tag = 'smem constant byte address 0x4 - core index']
  #allocation1 [shape = 'u32[72,128]{1,0:T(1,128)}', space=vmem, size = 0x9000, scoped, tag = 'internal scratch']
  #allocation2 [shape = 'f32[2,2,32]{2,1,0:T(2,128)}', space=vmem, size = 0x800, scoped, tag = 'scratch operand']
  #allocation3 [shape = 'f32[2,2,32]{2,1,0:T(2,128)}', space=vmem, size = 0x800, scoped, tag = 'scratch operand']
  #allocation4 [shape = 'f32[16,32]{1,0:T(8,128)}', space=vmem, size = 0x2000, scoped, tag = 'scratch operand']
  %s0 = inlined_call_operand.vmem [shape: f32[16,4], index: 0, kind: input, shape index: {}]
  %s1 = inlined_call_operand.vmem [shape: f32[4,16], index: 1, kind: input, shape index: {}]
  %s2 = inlined_call_operand.hbm [shape: f32[1,16], index: 2, kind: input, shape index: {}]
  %s3 = inlined_call_operand.hbm [shape: f32[1,16], index: 3, kind: input, shape index: {}]
  %s4 = inlined_call_operand.hbm [shape: f32[1,16], index: 4, kind: input, shape index: {}]
  %s5 = inlined_call_operand.hbm [shape: f32[1,16], index: 5, kind: input, shape index: {}]
  %s6 = inlined_call_operand.vmem [shape: f32[1,16], index: 6, kind: input, shape index: {}]
  %s7 = inlined_call_operand.vmem [shape: f32[2,2,32], index: 7, kind: input, shape index: {}]
  %s8 = inlined_call_operand.hbm [shape: f32[2,2,32], index: 8, kind: input, shape index: {}]
  %s9 = inlined_call_operand.vmem [shape: f32[16,128], index: 9, kind: input, shape index: {}]
  %s10 = inlined_call_operand.vmem [shape: f32[32,128], index: 10, kind: input, shape index: {}]
  %s11 = inlined_call_operand.vmem [shape: f32[1,128], index: 11, kind: input, shape index: {}]
  %s12 = inlined_call_operand.hbm [shape: f32[32,128], index: 12, kind: input, shape index: {}]
  %s13 = inlined_call_operand.hbm [shape: f32[32,128], index: 13, kind: input, shape index: {}]
  %s14 = inlined_call_operand.vmem [shape: f32[1,128], index: 14, kind: input, shape index: {}]
  %s15 = inlined_call_operand.vmem [shape: f32[32,2], index: 15, kind: input, shape index: {}]
  %s16 = inlined_call_operand.vmem [shape: f32[1,2], index: 16, kind: input, shape index: {}]
  %s17 = inlined_call_operand.hbm [shape: f32[2,2], index: 17, kind: output, shape index: {}]
  %s18 = sld [smem:[#allocation0]]
  $region114: #{tpu_custom_call.1} parent=0
    _
  %s20 = ssub.s32 1, %s18
  %s21 = scalar_select 0, %s20, %s18
  $region1: #{tpu_custom_call.1} parent=0
    #allocation5 [shape = 'u8[512]{0}', space=vmem, size = 0x400, scoped, tag = 'input window, operand 2, single buffered']
    #allocation6 [shape = 's32[1]{0}', space=sflag, size = 0x4, scoped, tag = 'scoped memory for tpu_custom_call.1']
    #allocation7 [shape = 's32[1]{0}', space=sflag, size = 0x4, scoped, tag = 'scoped memory for tpu_custom_call.1']
    #allocation8 [shape = 'u8[512]{0}', space=vmem, size = 0x400, scoped, tag = 'input window, operand 3, single buffered']
    #allocation9 [shape = 's32[1]{0}', space=sflag, size = 0x4, scoped, tag = 'scoped memory for tpu_custom_call.1']
    #allocation10 [shape = 'u8[512]{0}', space=vmem, size = 0x400, scoped, tag = 'input window, operand 4, single buffered']
    #allocation11 [shape = 'u8[512]{0}', space=vmem, size = 0x400, scoped, tag = 'input window, operand 5, single buffered']
    #allocation12 [shape = 's32[1]{0}', space=sflag, size = 0x4, scoped, tag = 'scoped memory for tpu_custom_call.1']
    #allocation13 [shape = 'u8[2048]{0}', space=vmem, size = 0x800, scoped, tag = 'input window, operand 8, single buffered']
    #allocation14 [shape = 'u8[16384]{0}', space=vmem, size = 0x4000, scoped, tag = 'input window, operand 12, single buffered']
    #allocation15 [shape = 's32[1]{0}', space=sflag, size = 0x4, scoped, tag = 'scoped memory for tpu_custom_call.1']
    #allocation16 [shape = 'u8[16384]{0}', space=vmem, size = 0x4000, scoped, tag = 'input window, operand 13, single buffered']
    #allocation17 [shape = 'u8[1024]{0}', space=vmem, size = 0x400, scoped, tag = 'output window, operand 0, single buffered']
    %22 = vsyncpa [#allocation6], 0
    %23 = vsyncpa [#allocation9], 0
    %24 = vsyncpa [#allocation12], 0
    %25 = vsyncpa [#allocation15], 0
    %26 = vsyncpa [#allocation7], 0
    // Predicated region
    $region2: #{tpu_custom_call.1} parent=1 // pred_check
      _
    $region3: #{tpu_custom_call.1} parent=1 // pred_check_branch
      %28 = sbr.rel (0) target = $region5
    $region4: #{tpu_custom_call.1} parent=1 // pred_region
      _
    $region5: #{tpu_custom_call.1} parent=1 // pred_fallthru
      _
    // Predicated region
    $region6: #{tpu_custom_call.1} parent=1 // pred_check
      _
    $region7: #{tpu_custom_call.1} parent=1 // pred_check_branch
      %30 = sbr.rel (0) target = $region9
    $region8: #{tpu_custom_call.1} parent=1 // pred_region
      _
    $region9: #{tpu_custom_call.1} parent=1 // pred_fallthru
      _
    // Predicated region
    $region10: #{tpu_custom_call.1} parent=1 // pred_check
      _
    $region11: #{tpu_custom_call.1} parent=1 // pred_check_branch
      %32 = sbr.rel (0) target = $region13
    $region12: #{tpu_custom_call.1} parent=1 // pred_region
      %34 = vsyncadd [#allocation6], 0
      %s36 = sshll.u32 %s2, 4
      %s37 = int_to_ptr.hbm [resolvable:$true] %s36
      %s38 = sshll.u32 [#allocation5], 4
      %s39 = int_to_ptr.vmem [resolvable:$true] %s38
      %41 = dma.hbm_to_vmem [thread:$0]  %s37, 16, %s39, [#allocation6]
    $region13: #{tpu_custom_call.1} parent=1 // pred_fallthru
      _
    // Predicated region
    $region14: #{tpu_custom_call.1} parent=1 // pred_check
      _
    $region15: #{tpu_custom_call.1} parent=1 // pred_check_branch
      %43 = sbr.rel (0) target = $region17
    $region16: #{tpu_custom_call.1} parent=1 // pred_region
      %45 = vsyncadd [#allocation9], 0
      %s47 = sshll.u32 %s3, 4
      %s48 = int_to_ptr.hbm [resolvable:$true] %s47
      %s49 = sshll.u32 [#allocation8], 4
      %s50 = int_to_ptr.vmem [resolvable:$true] %s49
      %52 = dma.hbm_to_vmem [thread:$0]  %s48, 16, %s50, [#allocation9]
    $region17: #{tpu_custom_call.1} parent=1 // pred_fallthru
      _
    // Predicated region
    $region18: #{tpu_custom_call.1} parent=1 // pred_check
      _
    $region19: #{tpu_custom_call.1} parent=1 // pred_check_branch
      %54 = sbr.rel (0) target = $region21
    $region20: #{tpu_custom_call.1} parent=1 // pred_region
      %56 = vsyncadd [#allocation9], 0
      %s58 = sshll.u32 %s4, 4
      %s59 = int_to_ptr.hbm [resolvable:$true] %s58
      %s60 = sshll.u32 [#allocation10], 4
      %s61 = int_to_ptr.vmem [resolvable:$true] %s60
      %63 = dma.hbm_to_vmem [thread:$0]  %s59, 16, %s61, [#allocation9]
    $region21: #{tpu_custom_call.1} parent=1 // pred_fallthru
      _
    // Predicated region
    $region22: #{tpu_custom_call.1} parent=1 // pred_check
      _
    $region23: #{tpu_custom_call.1} parent=1 // pred_check_branch
      %65 = sbr.rel (0) target = $region25
    $region24: #{tpu_custom_call.1} parent=1 // pred_region
      %67 = vsyncadd [#allocation12], 0
      %s69 = sshll.u32 %s5, 4
      %s70 = int_to_ptr.hbm [resolvable:$true] %s69
      %s71 = sshll.u32 [#allocation11], 4
      %s72 = int_to_ptr.vmem [resolvable:$true] %s71
      %74 = dma.hbm_to_vmem [thread:$0]  %s70, 16, %s72, [#allocation12]
    $region25: #{tpu_custom_call.1} parent=1 // pred_fallthru
      _
    // Predicated region
    $region26: #{tpu_custom_call.1} parent=1 // pred_check
      _
    $region27: #{tpu_custom_call.1} parent=1 // pred_check_branch
      %76 = sbr.rel (0) target = $region29
    $region28: #{tpu_custom_call.1} parent=1 // pred_region
      _
    $region29: #{tpu_custom_call.1} parent=1 // pred_fallthru
      _
    // Predicated region
    $region30: #{tpu_custom_call.1} parent=1 // pred_check
      _
    $region31: #{tpu_custom_call.1} parent=1 // pred_check_branch
      %78 = sbr.rel (0) target = $region33
    $region32: #{tpu_custom_call.1} parent=1 // pred_region
      _
    $region33: #{tpu_custom_call.1} parent=1 // pred_fallthru
      _
    // Predicated region
    $region34: #{tpu_custom_call.1} parent=1 // pred_check
      _
    $region35: #{tpu_custom_call.1} parent=1 // pred_check_branch
      %80 = sbr.rel (0) target = $region37
    $region36: #{tpu_custom_call.1} parent=1 // pred_region
      %82 = vsyncadd [#allocation12], 0
      %s83 = sshll.u32 %s8, 4
      %s84 = int_to_ptr.hbm [resolvable:$true] %s83
      %s85 = sshll.u32 [#allocation13], 4
      %s86 = int_to_ptr.vmem [resolvable:$true] %s85
      %91 = dma.hbm_to_vmem [thread:$0]  %s84, 64, %s86, [#allocation12], 32, 32, 2
    $region37: #{tpu_custom_call.1} parent=1 // pred_fallthru
      _
    // Predicated region
    $region38: #{tpu_custom_call.1} parent=1 // pred_check
      _
    $region39: #{tpu_custom_call.1} parent=1 // pred_check_branch
      %93 = sbr.rel (0) target = $region41
    $region40: #{tpu_custom_call.1} parent=1 // pred_region
      _
    $region41: #{tpu_custom_call.1} parent=1 // pred_fallthru
      _
    // Predicated region
    $region42: #{tpu_custom_call.1} parent=1 // pred_check
      _
    $region43: #{tpu_custom_call.1} parent=1 // pred_check_branch
      %95 = sbr.rel (0) target = $region45
    $region44: #{tpu_custom_call.1} parent=1 // pred_region
      _
    $region45: #{tpu_custom_call.1} parent=1 // pred_fallthru
      _
    // Predicated region
    $region46: #{tpu_custom_call.1} parent=1 // pred_check
      _
    $region47: #{tpu_custom_call.1} parent=1 // pred_check_branch
      %97 = sbr.rel (0) target = $region49
    $region48: #{tpu_custom_call.1} parent=1 // pred_region
      _
    $region49: #{tpu_custom_call.1} parent=1 // pred_fallthru
      _
    // Predicated region
    $region50: #{tpu_custom_call.1} parent=1 // pred_check
      _
    $region51: #{tpu_custom_call.1} parent=1 // pred_check_branch
      %99 = sbr.rel (0) target = $region53
    $region52: #{tpu_custom_call.1} parent=1 // pred_region
      %101 = vsyncadd [#allocation15], 0
      %s102 = sshll.u32 %s12, 4
      %s103 = int_to_ptr.hbm [resolvable:$true] %s102
      %s104 = sshll.u32 [#allocation14], 4
      %s105 = int_to_ptr.vmem [resolvable:$true] %s104
      %110 = dma.hbm_to_vmem [thread:$0]  %s103, 512, %s105, [#allocation15], 128, 128, 8
    $region53: #{tpu_custom_call.1} parent=1 // pred_fallthru
      _
    // Predicated region
    $region54: #{tpu_custom_call.1} parent=1 // pred_check
      _
    $region55: #{tpu_custom_call.1} parent=1 // pred_check_branch
      %112 = sbr.rel (0) target = $region57
    $region56: #{tpu_custom_call.1} parent=1 // pred_region
      %114 = vsyncadd [#allocation15], 0
      %s115 = sshll.u32 %s13, 4
      %s116 = int_to_ptr.hbm [resolvable:$true] %s115
      %s117 = sshll.u32 [#allocation16], 4
      %s118 = int_to_ptr.vmem [resolvable:$true] %s117
      %123 = dma.hbm_to_vmem [thread:$0]  %s116, 512, %s118, [#allocation15], 128, 128, 8
    $region57: #{tpu_custom_call.1} parent=1 // pred_fallthru
      _
    // Predicated region
    $region58: #{tpu_custom_call.1} parent=1 // pred_check
      _
    $region59: #{tpu_custom_call.1} parent=1 // pred_check_branch
      %125 = sbr.rel (0) target = $region61
    $region60: #{tpu_custom_call.1} parent=1 // pred_region
      _
    $region61: #{tpu_custom_call.1} parent=1 // pred_fallthru
      _
    // Predicated region
    $region62: #{tpu_custom_call.1} parent=1 // pred_check
      _
    $region63: #{tpu_custom_call.1} parent=1 // pred_check_branch
      %127 = sbr.rel (0) target = $region65
    $region64: #{tpu_custom_call.1} parent=1 // pred_region
      _
    $region65: #{tpu_custom_call.1} parent=1 // pred_fallthru
      _
    // Predicated region
    $region66: #{tpu_custom_call.1} parent=1 // pred_check
      _
    $region67: #{tpu_custom_call.1} parent=1 // pred_check_branch
      %129 = sbr.rel (0) target = $region69
    $region68: #{tpu_custom_call.1} parent=1 // pred_region
      _
    $region69: #{tpu_custom_call.1} parent=1 // pred_fallthru
      _
    // Predicated region
    $region70: #{tpu_custom_call.1} parent=1 // pred_check
      _
    $region71: #{tpu_custom_call.1} parent=1 // pred_check_branch
      %131 = sbr.rel (0) target = $region73
    $region72: #{tpu_custom_call.1} parent=1 // pred_region
      %133 = dma.done [#allocation6], 16
    $region73: #{tpu_custom_call.1} parent=1 // pred_fallthru
      _
    // Predicated region
    $region74: #{tpu_custom_call.1} parent=1 // pred_check
      _
    $region75: #{tpu_custom_call.1} parent=1 // pred_check_branch
      %135 = sbr.rel (0) target = $region77
    $region76: #{tpu_custom_call.1} parent=1 // pred_region
      %137 = dma.done [#allocation9], 16
    $region77: #{tpu_custom_call.1} parent=1 // pred_fallthru
      _
    // Predicated region
    $region78: #{tpu_custom_call.1} parent=1 // pred_check
      _
    $region79: #{tpu_custom_call.1} parent=1 // pred_check_branch
      %139 = sbr.rel (0) target = $region81
    $region80: #{tpu_custom_call.1} parent=1 // pred_region
      %141 = dma.done [#allocation9], 16
    $region81: #{tpu_custom_call.1} parent=1 // pred_fallthru
      _
    // Predicated region
    $region82: #{tpu_custom_call.1} parent=1 // pred_check
      _
    $region83: #{tpu_custom_call.1} parent=1 // pred_check_branch
      %143 = sbr.rel (0) target = $region85
    $region84: #{tpu_custom_call.1} parent=1 // pred_region
      %145 = dma.done [#allocation12], 16
    $region85: #{tpu_custom_call.1} parent=1 // pred_fallthru
      _
    // Predicated region
    $region86: #{tpu_custom_call.1} parent=1 // pred_check
      _
    $region87: #{tpu_custom_call.1} parent=1 // pred_check_branch
      %147 = sbr.rel (0) target = $region89
    $region88: #{tpu_custom_call.1} parent=1 // pred_region
      %149 = dma.done [#allocation12], 64
    $region89: #{tpu_custom_call.1} parent=1 // pred_fallthru
      _
    // Predicated region
    $region90: #{tpu_custom_call.1} parent=1 // pred_check
      _
    $region91: #{tpu_custom_call.1} parent=1 // pred_check_branch
      %151 = sbr.rel (0) target = $region93
    $region92: #{tpu_custom_call.1} parent=1 // pred_region
      %153 = dma.done [#allocation15], 512
    $region93: #{tpu_custom_call.1} parent=1 // pred_fallthru
      _
    // Predicated region
    $region94: #{tpu_custom_call.1} parent=1 // pred_check
      _
    $region95: #{tpu_custom_call.1} parent=1 // pred_check_branch
      %155 = sbr.rel (0) target = $region97
    $region96: #{tpu_custom_call.1} parent=1 // pred_region
      %157 = dma.done [#allocation15], 512
    $region97: #{tpu_custom_call.1} parent=1 // pred_fallthru
      _
    %p158 = scmp.eq.s32.totalorder 0, 0
    // Predicated region
    $region98: #{tpu_custom_call.1} parent=1 // pred_check
      %p159 = pneg %p158
    $region99: #{tpu_custom_call.1} parent=1 // pred_check_branch
      %161 = sbr.rel (%p159) target = $region101
    $region100: #{tpu_custom_call.1} parent=1 // pred_region
      %v162 = vld [vmem:[%s7] sm:$0x3]
      %v163 = vld [vmem:[%s7 + $0x2] sm:$0x3]
      %vm164 = vcmask 254976
      %165 = vst.msk [vmem:[#allocation2] sm:$0x3] %vm164, %v162
      %166 = vst.msk [vmem:[#allocation2 + $0x2] sm:$0x3] %vm164, %v163
      %v167 = vld [vmem:[#allocation13] sm:$0x3]
      %v168 = vld [vmem:[#allocation13 + $0x2] sm:$0x3]
      %169 = vst.msk [vmem:[#allocation3] sm:$0x3] %vm164, %v167
      %170 = vst.msk [vmem:[#allocation3 + $0x2] sm:$0x3] %vm164, %v168
    $region101: #{tpu_custom_call.1} parent=1 // pred_fallthru
      _
    %v171 = vld [vmem:[%s0] sm:$0xff]
    %v172 = vld [vmem:[%s0 + $0x8] sm:$0xff]
    %v173 = vld [vmem:[%s1] sm:$0xf]
    %v174 = vld [vmem:[#allocation5] sm:$0x1]
    %v176 = vperm.slane %v174, 0
    %vm178 = vcmask 31744
    %v180 = vsel %vm178, %v171, 0
    %v183 = vsel %vm178, %v172, 0
    %vm185 = vcmask 1043456
    %v187 = vsel %vm185, %v173, 0
    %189 = vmatpush.msra.mxu0 0.0
    %190 = vmatpush.msra.mxu0 0.0
    %191 = vmatpush.msra.mxu0 0.0
    %192 = vmatpush.msra.mxu0 0.0
    %193 = vmatpush.msra.mxu0 0.0
    %194 = vmatpush.msra.mxu0 0.0
    %195 = vmatpush.msra.mxu0 0.0
    %196 = vmatpush.msra.mxu0 0.0
    %197 = vmatpush.msra.mxu0 0.0
    %198 = vmatpush.msra.mxu0 0.0
    %199 = vmatpush.msra.mxu0 0.0
    %200 = vmatpush.msra.mxu0 0.0
    %201 = vmatpush.msra.mxu0 0.0
    %202 = vmatpush.msra.mxu0 0.0
    %203 = vmatpush.msra.mxu0 0.0
    %204 = vmatpush.msra.mxu0 %v187
    %205 = vmatmul.f32.gmra.mxu0 %v180
    %v206 = vpop.f32.mrf.mxu0
    %v207 = vadd.f32 %v176, %v206
    %208 = vmatmul.f32.gmra.mxu0 %v183
    %v209 = vpop.f32.mrf.mxu0
    %v210 = vadd.f32 %v176, %v209
    %211 = vdwg.mxu0
    %v212 = vld [vmem:[#allocation8] sm:$0x1]
    %v213 = vld [vmem:[%s6] sm:$0x1]
    %v214 = vadd.f32 %v213, 1e-05
    %v215 = vrsqrt.pop %v214
    %v216 = vmul.f32 %v215, %v214
    %v217 = vmul.f32 %v216, %v215
    %v218 = vmul.f32 0.5, %v217
    %v219 = vsub.f32 1.5, %v218
    %v220 = vmul.f32 %v215, %v219
    %vm221 = vweird.f32 %v214
    %vm222 = vweird.f32 %v215
    %vm223 = vmor %vm221, %vm222
    %v224 = vsel %vm223, %v215, %v220
    %v225 = vmul.f32 %v212, %v224
    %v226 = vld [vmem:[#allocation10] sm:$0x1]
    %v227 = vld [vmem:[#allocation11] sm:$0x1]
    %v228 = vmul.f32 %v227, %v225
    %v229 = vsub.f32 %v226, %v228
    %v231 = vperm.slane %v225, 0
    %v233 = vmul.f32 %v207, %v231
    %v234 = vmul.f32 %v210, %v231
    %v236 = vperm.slane %v229, 0
    %v238 = vadd.f32 %v233, %v236
    %v239 = vadd.f32 %v234, %v236
    %v240 = vlaneseq
    %v241 = vand.u32 %v240, 127
    %vm242 = vcmp.ge.s32.totalorder %v241, 64
    %vm243 = vcmp.lt.s32.totalorder %v241, 96
    %vm244 = vmand %vm242, %vm243
    %v245 = vld [vmem:[%s9] sm:$0xff]
    %v246 = vld [vmem:[%s9 + $0x8] sm:$0xff]
    %v247 = vld [vmem:[%s11] sm:$0x1]
    %v249 = vperm.slane %v247, 0
    %vm251 = vcmask 130048
    %v253 = vsel %vm251, %v238, 0
    %v256 = vsel %vm251, %v239, 0
    %258 = vmatpush.msra.mxu0 0.0
    %259 = vmatpush.msra.mxu0 0.0
    %260 = vmatpush.msra.mxu0 0.0
    %261 = vmatpush.msra.mxu0 0.0
    %262 = vmatpush.msra.mxu0 0.0
    %263 = vmatpush.msra.mxu0 0.0
    %264 = vmatpush.msra.mxu0 0.0
    %265 = vmatpush.msra.mxu0 0.0
    %266 = vmatpush.msra.mxu0 0.0
    %267 = vmatpush.msra.mxu0 0.0
    %268 = vmatpush.msra.mxu0 0.0
    %269 = vmatpush.msra.mxu0 0.0
    %270 = vmatpush.msra.mxu0 0.0
    %271 = vmatpush.msra.mxu0 0.0
    %272 = vmatpush.msra.mxu0 %v246
    %273 = vmatpush.msra.mxu0 %v245
    %274 = vmatmul.f32.gmra.mxu0 %v253
    %v275 = vpop.f32.mrf.mxu0
    %v276 = vadd.f32 %v249, %v275
    %277 = vmatmul.f32.gmra.mxu0 %v256
    %v278 = vpop.f32.mrf.mxu0
    %v279 = vadd.f32 %v249, %v278
    %280 = vdwg.mxu0
    %v281 = vld [vmem:[%s10] sm:$0xff]
    %v282 = vld [vmem:[%s10 + $0x8] sm:$0xff]
    %v283 = vld [vmem:[%s10 + $0x10] sm:$0xff]
    %v284 = vld [vmem:[%s10 + $0x18] sm:$0xff]
    %v285 = vld [vmem:[#allocation2] sm:$0x3]
    %v286 = vld [vmem:[#allocation3] sm:$0x3]
    %vm287 = vcmask 261120
    %v289 = vsel %vm287, %v285, 0
    %291 = vmatpush.msra.mxu0 0.0
    %292 = vmatpush.msra.mxu0 0.0
    %293 = vmatpush.msra.mxu0 0.0
    %294 = vmatpush.msra.mxu0 0.0
    %295 = vmatpush.msra.mxu0 0.0
    %296 = vmatpush.msra.mxu0 0.0
    %297 = vmatpush.msra.mxu0 0.0
    %298 = vmatpush.msra.mxu0 0.0
    %299 = vmatpush.msra.mxu0 0.0
    %300 = vmatpush.msra.mxu0 0.0
    %301 = vmatpush.msra.mxu0 0.0
    %302 = vmatpush.msra.mxu0 0.0
    %303 = vmatpush.msra.mxu0 %v284
    %304 = vmatpush.msra.mxu0 %v283
    %305 = vmatpush.msra.mxu0 %v282
    %306 = vmatpush.msra.mxu0 %v281
    %307 = vmatmul.f32.gmra.mxu0 %v289
    %v308 = vpop.f32.mrf.mxu0
    %v309 = vadd.f32 0.0, %v308
    %310 = vdwg.mxu0
    %v311 = vadd.f32 %v276, %v309
    %v312 = vtanh.pop %v311
    %v313 = vxor.u32 %v311, 2147483648
    %v314 = vmul.f32 %v313, 1.442695
    %v315 = vpow.pop %v314
    %v316 = vadd.f32 %v315, 1.0
    %v317 = vrcp.pop %v316
    %v318 = vmul.f32 %v316, %v317
    %v319 = vsub.f32 1.0, %v318
    %v320 = vmul.f32 %v317, %v319
    %v321 = vadd.f32 %v317, %v320
    %vm322 = vweird.f32 %v316
    %vm323 = vweird.f32 %v317
    %vm324 = vmor %vm322, %vm323
    %v325 = vsel %vm324, %v317, %v321
    %v326 = vand.u32 2147483647, %v316
    %vm327 = vcmp.eq.f32.partialorder %v326, 8.507059e+37
    %v328 = vand.u32 %v316, 2147483648
    %v329 = vor.u32 1.1754944e-38, %v328
    %v330 = vsel %vm327, %v329, %v325
    %v331 = vmul.f32 1.0, %v330
    %v332 = vsel %vm244, %v312, %v331
    %334 = vrot.lane.b32.xlu0 %v286, 32
    %v335 = vpop.permute.xlu0 %334
    %v337 = vmul.f32 %v332, %v335
    %339 = vrot.lane.b32.xlu0 %v332, 64
    %v340 = vpop.permute.xlu0 %339
    %v342 = vmul.f32 %v332, %v340
    %344 = vrot.lane.b32.xlu0 %v342, 32
    %v345 = vpop.permute.xlu0 %344
    %v347 = vadd.f32 %v337, %v345
    %v348 = vtanh.pop %v347
    %350 = vrot.lane.b32.xlu0 %v348, 64
    %v351 = vpop.permute.xlu0 %350
    %v353 = vmul.f32 %v332, %v351
    %355 = vrot.lane.b32.xlu0 %v353, 32
    %v356 = vpop.permute.xlu0 %355
    %vm358 = vcmask 254976
    %359 = vst.msk [vmem:[#allocation4] sm:$0x3] %vm358, %v356
    %v360 = vsel %vm287, %v356, 0
    %362 = vmatpush.msra.mxu0 0.0
    %363 = vmatpush.msra.mxu0 0.0
    %364 = vmatpush.msra.mxu0 0.0
    %365 = vmatpush.msra.mxu0 0.0
    %366 = vmatpush.msra.mxu0 0.0
    %367 = vmatpush.msra.mxu0 0.0
    %368 = vmatpush.msra.mxu0 0.0
    %369 = vmatpush.msra.mxu0 0.0
    %370 = vmatpush.msra.mxu0 0.0
    %371 = vmatpush.msra.mxu0 0.0
    %372 = vmatpush.msra.mxu0 0.0
    %373 = vmatpush.msra.mxu0 0.0
    %374 = vmatpush.msra.mxu0 %v284
    %375 = vmatpush.msra.mxu0 %v283
    %376 = vmatpush.msra.mxu0 %v282
    %377 = vmatpush.msra.mxu0 %v281
    %378 = vmatmul.f32.gmra.mxu0 %v360
    %v379 = vpop.f32.mrf.mxu0
    %v380 = vadd.f32 0.0, %v379
    %381 = vdwg.mxu0
    %v383 = vrot.slane %v380, 6
    %v385 = vadd.f32 %v276, %v383
    %v386 = vtanh.pop %v385
    %v387 = vxor.u32 %v385, 2147483648
    %v388 = vmul.f32 %v387, 1.442695
    %v389 = vpow.pop %v388
    %v390 = vadd.f32 %v389, 1.0
    %v391 = vrcp.pop %v390
    %v392 = vmul.f32 %v390, %v391
    %v393 = vsub.f32 1.0, %v392
    %v394 = vmul.f32 %v391, %v393
    %v395 = vadd.f32 %v391, %v394
    %vm396 = vweird.f32 %v390
    %vm397 = vweird.f32 %v391
    %vm398 = vmor %vm396, %vm397
    %v399 = vsel %vm398, %v391, %v395
    %v400 = vand.u32 2147483647, %v390
    %vm401 = vcmp.eq.f32.partialorder %v400, 8.507059e+37
    %v402 = vand.u32 %v390, 2147483648
    %v403 = vor.u32 1.1754944e-38, %v402
    %v404 = vsel %vm401, %v403, %v399
    %v405 = vmul.f32 1.0, %v404
    %v406 = vsel %vm244, %v386, %v405
    %v408 = vrot.slane %v347, 6
    %v410 = vmul.f32 %v406, %v408
    %412 = vrot.lane.b32.xlu0 %v406, 64
    %v413 = vpop.permute.xlu0 %412
    %v415 = vmul.f32 %v406, %v413
    %417 = vrot.lane.b32.xlu0 %v415, 32
    %v418 = vpop.permute.xlu0 %417
    %v420 = vadd.f32 %v410, %v418
    %v421 = vtanh.pop %v420
    %423 = vrot.lane.b32.xlu0 %v421, 64
    %v424 = vpop.permute.xlu0 %423
    %v426 = vmul.f32 %v406, %v424
    %428 = vrot.lane.b32.xlu0 %v426, 32
    %v429 = vpop.permute.xlu0 %428
    %vm431 = vcmask 257026
    %432 = vst.msk [vmem:[#allocation4] sm:$0xc] %vm431, %v429
    %v433 = vrot.slane %v426, 2
    %434 = vrot.lane.b32.xlu0 %v433, 32
    %v435 = vpop.permute.xlu0 %434
    %v436 = vsel %vm287, %v435, 0
    %438 = vmatpush.msra.mxu0 0.0
    %439 = vmatpush.msra.mxu0 0.0
    %440 = vmatpush.msra.mxu0 0.0
    %441 = vmatpush.msra.mxu0 0.0
    %442 = vmatpush.msra.mxu0 0.0
    %443 = vmatpush.msra.mxu0 0.0
    %444 = vmatpush.msra.mxu0 0.0
    %445 = vmatpush.msra.mxu0 0.0
    %446 = vmatpush.msra.mxu0 0.0
    %447 = vmatpush.msra.mxu0 0.0
    %448 = vmatpush.msra.mxu0 0.0
    %449 = vmatpush.msra.mxu0 0.0
    %450 = vmatpush.msra.mxu0 %v284
    %451 = vmatpush.msra.mxu0 %v283
    %452 = vmatpush.msra.mxu0 %v282
    %453 = vmatpush.msra.mxu0 %v281
    %454 = vmatmul.f32.gmra.mxu0 %v436
    %v455 = vpop.f32.mrf.mxu0
    %v456 = vadd.f32 0.0, %v455
    %457 = vdwg.mxu0
    %v459 = vrot.slane %v456, 4
    %v461 = vadd.f32 %v276, %v459
    %v462 = vtanh.pop %v461
    %v463 = vxor.u32 %v461, 2147483648
    %v464 = vmul.f32 %v463, 1.442695
    %v465 = vpow.pop %v464
    %v466 = vadd.f32 %v465, 1.0
    %v467 = vrcp.pop %v466
    %v468 = vmul.f32 %v466, %v467
    %v469 = vsub.f32 1.0, %v468
    %v470 = vmul.f32 %v467, %v469
    %v471 = vadd.f32 %v467, %v470
    %vm472 = vweird.f32 %v466
    %vm473 = vweird.f32 %v467
    %vm474 = vmor %vm472, %vm473
    %v475 = vsel %vm474, %v467, %v471
    %v476 = vand.u32 2147483647, %v466
    %vm477 = vcmp.eq.f32.partialorder %v476, 8.507059e+37
    %v478 = vand.u32 %v466, 2147483648
    %v479 = vor.u32 1.1754944e-38, %v478
    %v480 = vsel %vm477, %v479, %v475
    %v481 = vmul.f32 1.0, %v480
    %v482 = vsel %vm244, %v462, %v481
    %v484 = vrot.slane %v420, 6
    %v486 = vmul.f32 %v482, %v484
    %488 = vrot.lane.b32.xlu0 %v482, 64
    %v489 = vpop.permute.xlu0 %488
    %v491 = vmul.f32 %v482, %v489
    %493 = vrot.lane.b32.xlu0 %v491, 32
    %v494 = vpop.permute.xlu0 %493
    %v496 = vadd.f32 %v486, %v494
    %v497 = vtanh.pop %v496
    %499 = vrot.lane.b32.xlu0 %v497, 64
    %v500 = vpop.permute.xlu0 %499
    %v502 = vmul.f32 %v482, %v500
    %504 = vrot.lane.b32.xlu0 %v502, 32
    %v505 = vpop.permute.xlu0 %504
    %vm507 = vcmask 259076
    %508 = vst.msk [vmem:[#allocation4] sm:$0x30] %vm507, %v505
    %v509 = vrot.slane %v502, 4
    %510 = vrot.lane.b32.xlu0 %v509, 32
    %v511 = vpop.permute.xlu0 %510
    %v512 = vsel %vm287, %v511, 0
    %514 = vmatpush.msra.mxu0 0.0
    %515 = vmatpush.msra.mxu0 0.0
    %516 = vmatpush.msra.mxu0 0.0
    %517 = vmatpush.msra.mxu0 0.0
    %518 = vmatpush.msra.mxu0 0.0
    %519 = vmatpush.msra.mxu0 0.0
    %520 = vmatpush.msra.mxu0 0.0
    %521 = vmatpush.msra.mxu0 0.0
    %522 = vmatpush.msra.mxu0 0.0
    %523 = vmatpush.msra.mxu0 0.0
    %524 = vmatpush.msra.mxu0 0.0
    %525 = vmatpush.msra.mxu0 0.0
    %526 = vmatpush.msra.mxu0 %v284
    %527 = vmatpush.msra.mxu0 %v283
    %528 = vmatpush.msra.mxu0 %v282
    %529 = vmatpush.msra.mxu0 %v281
    %530 = vmatmul.f32.gmra.mxu0 %v512
    %v531 = vpop.f32.mrf.mxu0
    %v532 = vadd.f32 0.0, %v531
    %533 = vdwg.mxu0
    %v535 = vrot.slane %v532, 2
    %v537 = vadd.f32 %v276, %v535
    %v538 = vtanh.pop %v537
    %v539 = vxor.u32 %v537, 2147483648
    %v540 = vmul.f32 %v539, 1.442695
    %v541 = vpow.pop %v540
    %v542 = vadd.f32 %v541, 1.0
    %v543 = vrcp.pop %v542
    %v544 = vmul.f32 %v542, %v543
    %v545 = vsub.f32 1.0, %v544
    %v546 = vmul.f32 %v543, %v545
    %v547 = vadd.f32 %v543, %v546
    %vm548 = vweird.f32 %v542
    %vm549 = vweird.f32 %v543
    %vm550 = vmor %vm548, %vm549
    %v551 = vsel %vm550, %v543, %v547
    %v552 = vand.u32 2147483647, %v542
    %vm553 = vcmp.eq.f32.partialorder %v552, 8.507059e+37
    %v554 = vand.u32 %v542, 2147483648
    %v555 = vor.u32 1.1754944e-38, %v554
    %v556 = vsel %vm553, %v555, %v551
    %v557 = vmul.f32 1.0, %v556
    %v558 = vsel %vm244, %v538, %v557
    %v560 = vrot.slane %v496, 6
    %v562 = vmul.f32 %v558, %v560
    %564 = vrot.lane.b32.xlu0 %v558, 64
    %v565 = vpop.permute.xlu0 %564
    %v567 = vmul.f32 %v558, %v565
    %569 = vrot.lane.b32.xlu0 %v567, 32
    %v570 = vpop.permute.xlu0 %569
    %v572 = vadd.f32 %v562, %v570
    %v573 = vtanh.pop %v572
    %575 = vrot.lane.b32.xlu0 %v573, 64
    %v576 = vpop.permute.xlu0 %575
    %v578 = vmul.f32 %v558, %v576
    %580 = vrot.lane.b32.xlu0 %v578, 32
    %v581 = vpop.permute.xlu0 %580
    %vm583 = vcmask 261126
    %584 = vst.msk [vmem:[#allocation4] sm:$0xc0] %vm583, %v581
    %v585 = vrot.slane %v578, 6
    %586 = vrot.lane.b32.xlu0 %v585, 32
    %v587 = vpop.permute.xlu0 %586
    %v588 = vsel %vm287, %v587, 0
    %590 = vmatpush.msra.mxu0 0.0
    %591 = vmatpush.msra.mxu0 0.0
    %592 = vmatpush.msra.mxu0 0.0
    %593 = vmatpush.msra.mxu0 0.0
    %594 = vmatpush.msra.mxu0 0.0
    %595 = vmatpush.msra.mxu0 0.0
    %596 = vmatpush.msra.mxu0 0.0
    %597 = vmatpush.msra.mxu0 0.0
    %598 = vmatpush.msra.mxu0 0.0
    %599 = vmatpush.msra.mxu0 0.0
    %600 = vmatpush.msra.mxu0 0.0
    %601 = vmatpush.msra.mxu0 0.0
    %602 = vmatpush.msra.mxu0 %v284
    %603 = vmatpush.msra.mxu0 %v283
    %604 = vmatpush.msra.mxu0 %v282
    %605 = vmatpush.msra.mxu0 %v281
    %606 = vmatmul.f32.gmra.mxu0 %v588
    %v607 = vpop.f32.mrf.mxu0
    %v608 = vadd.f32 0.0, %v607
    %609 = vdwg.mxu0
    %v610 = vadd.f32 %v279, %v608
    %v611 = vtanh.pop %v610
    %v612 = vxor.u32 %v610, 2147483648
    %v613 = vmul.f32 %v612, 1.442695
    %v614 = vpow.pop %v613
    %v615 = vadd.f32 %v614, 1.0
    %v616 = vrcp.pop %v615
    %v617 = vmul.f32 %v615, %v616
    %v618 = vsub.f32 1.0, %v617
    %v619 = vmul.f32 %v616, %v618
    %v620 = vadd.f32 %v616, %v619
    %vm621 = vweird.f32 %v615
    %vm622 = vweird.f32 %v616
    %vm623 = vmor %vm621, %vm622
    %v624 = vsel %vm623, %v616, %v620
    %v625 = vand.u32 2147483647, %v615
    %vm626 = vcmp.eq.f32.partialorder %v625, 8.507059e+37
    %v627 = vand.u32 %v615, 2147483648
    %v628 = vor.u32 1.1754944e-38, %v627
    %v629 = vsel %vm626, %v628, %v624
    %v630 = vmul.f32 1.0, %v629
    %v631 = vsel %vm244, %v611, %v630
    %v633 = vrot.slane %v572, 6
    %v635 = vmul.f32 %v631, %v633
    %637 = vrot.lane.b32.xlu0 %v631, 64
    %v638 = vpop.permute.xlu0 %637
    %v640 = vmul.f32 %v631, %v638
    %642 = vrot.lane.b32.xlu0 %v640, 32
    %v643 = vpop.permute.xlu0 %642
    %v645 = vadd.f32 %v635, %v643
    %v646 = vtanh.pop %v645
    %648 = vrot.lane.b32.xlu0 %v646, 64
    %v649 = vpop.permute.xlu0 %648
    %v651 = vmul.f32 %v631, %v649
    %653 = vrot.lane.b32.xlu0 %v651, 32
    %v654 = vpop.permute.xlu0 %653
    %656 = vst.msk [vmem:[#allocation4 + $0x8] sm:$0x3] %vm358, %v654
    %v657 = vsel %vm287, %v654, 0
    %659 = vmatpush.msra.mxu0 0.0
    %660 = vmatpush.msra.mxu0 0.0
    %661 = vmatpush.msra.mxu0 0.0
    %662 = vmatpush.msra.mxu0 0.0
    %663 = vmatpush.msra.mxu0 0.0
    %664 = vmatpush.msra.mxu0 0.0
    %665 = vmatpush.msra.mxu0 0.0
    %666 = vmatpush.msra.mxu0 0.0
    %667 = vmatpush.msra.mxu0 0.0
    %668 = vmatpush.msra.mxu0 0.0
    %669 = vmatpush.msra.mxu0 0.0
    %670 = vmatpush.msra.mxu0 0.0
    %671 = vmatpush.msra.mxu0 %v284
    %672 = vmatpush.msra.mxu0 %v283
    %673 = vmatpush.msra.mxu0 %v282
    %674 = vmatpush.msra.mxu0 %v281
    %675 = vmatmul.f32.gmra.mxu0 %v657
    %v676 = vpop.f32.mrf.mxu0
    %v677 = vadd.f32 0.0, %v676
    %678 = vdwg.mxu0
    %v680 = vrot.slane %v677, 6
    %v682 = vadd.f32 %v279, %v680
    %v683 = vtanh.pop %v682
    %v684 = vxor.u32 %v682, 2147483648
    %v685 = vmul.f32 %v684, 1.442695
    %v686 = vpow.pop %v685
    %v687 = vadd.f32 %v686, 1.0
    %v688 = vrcp.pop %v687
    %v689 = vmul.f32 %v687, %v688
    %v690 = vsub.f32 1.0, %v689
    %v691 = vmul.f32 %v688, %v690
    %v692 = vadd.f32 %v688, %v691
    %vm693 = vweird.f32 %v687
    %vm694 = vweird.f32 %v688
    %vm695 = vmor %vm693, %vm694
    %v696 = vsel %vm695, %v688, %v692
    %v697 = vand.u32 2147483647, %v687
    %vm698 = vcmp.eq.f32.partialorder %v697, 8.507059e+37
    %v699 = vand.u32 %v687, 2147483648
    %v700 = vor.u32 1.1754944e-38, %v699
    %v701 = vsel %vm698, %v700, %v696
    %v702 = vmul.f32 1.0, %v701
    %v703 = vsel %vm244, %v683, %v702
    %v705 = vrot.slane %v645, 6
    %v707 = vmul.f32 %v703, %v705
    %709 = vrot.lane.b32.xlu0 %v703, 64
    %v710 = vpop.permute.xlu0 %709
    %v712 = vmul.f32 %v703, %v710
    %714 = vrot.lane.b32.xlu0 %v712, 32
    %v715 = vpop.permute.xlu0 %714
    %v717 = vadd.f32 %v707, %v715
    %v718 = vtanh.pop %v717
    %720 = vrot.lane.b32.xlu0 %v718, 64
    %v721 = vpop.permute.xlu0 %720
    %v723 = vmul.f32 %v703, %v721
    %725 = vrot.lane.b32.xlu0 %v723, 32
    %v726 = vpop.permute.xlu0 %725
    %728 = vst.msk [vmem:[#allocation4 + $0x8] sm:$0xc] %vm431, %v726
    %v729 = vrot.slane %v723, 2
    %730 = vrot.lane.b32.xlu0 %v729, 32
    %v731 = vpop.permute.xlu0 %730
    %v732 = vsel %vm287, %v731, 0
    %734 = vmatpush.msra.mxu0 0.0
    %735 = vmatpush.msra.mxu0 0.0
    %736 = vmatpush.msra.mxu0 0.0
    %737 = vmatpush.msra.mxu0 0.0
    %738 = vmatpush.msra.mxu0 0.0
    %739 = vmatpush.msra.mxu0 0.0
    %740 = vmatpush.msra.mxu0 0.0
    %741 = vmatpush.msra.mxu0 0.0
    %742 = vmatpush.msra.mxu0 0.0
    %743 = vmatpush.msra.mxu0 0.0
    %744 = vmatpush.msra.mxu0 0.0
    %745 = vmatpush.msra.mxu0 0.0
    %746 = vmatpush.msra.mxu0 %v284
    %747 = vmatpush.msra.mxu0 %v283
    %748 = vmatpush.msra.mxu0 %v282
    %749 = vmatpush.msra.mxu0 %v281
    %750 = vmatmul.f32.gmra.mxu0 %v732
    %v751 = vpop.f32.mrf.mxu0
    %v752 = vadd.f32 0.0, %v751
    %753 = vdwg.mxu0
    %v755 = vrot.slane %v752, 4
    %v757 = vadd.f32 %v279, %v755
    %v758 = vtanh.pop %v757
    %v759 = vxor.u32 %v757, 2147483648
    %v760 = vmul.f32 %v759, 1.442695
    %v761 = vpow.pop %v760
    %v762 = vadd.f32 %v761, 1.0
    %v763 = vrcp.pop %v762
    %v764 = vmul.f32 %v762, %v763
    %v765 = vsub.f32 1.0, %v764
    %v766 = vmul.f32 %v763, %v765
    %v767 = vadd.f32 %v763, %v766
    %vm768 = vweird.f32 %v762
    %vm769 = vweird.f32 %v763
    %vm770 = vmor %vm768, %vm769
    %v771 = vsel %vm770, %v763, %v767
    %v772 = vand.u32 2147483647, %v762
    %vm773 = vcmp.eq.f32.partialorder %v772, 8.507059e+37
    %v774 = vand.u32 %v762, 2147483648
    %v775 = vor.u32 1.1754944e-38, %v774
    %v776 = vsel %vm773, %v775, %v771
    %v777 = vmul.f32 1.0, %v776
    %v778 = vsel %vm244, %v758, %v777
    %v780 = vrot.slane %v717, 6
    %v782 = vmul.f32 %v778, %v780
    %784 = vrot.lane.b32.xlu0 %v778, 64
    %v785 = vpop.permute.xlu0 %784
    %v787 = vmul.f32 %v778, %v785
    %789 = vrot.lane.b32.xlu0 %v787, 32
    %v790 = vpop.permute.xlu0 %789
    %v792 = vadd.f32 %v782, %v790
    %v793 = vtanh.pop %v792
    %795 = vrot.lane.b32.xlu0 %v793, 64
    %v796 = vpop.permute.xlu0 %795
    %v798 = vmul.f32 %v778, %v796
    %800 = vrot.lane.b32.xlu0 %v798, 32
    %v801 = vpop.permute.xlu0 %800
    %803 = vst.msk [vmem:[#allocation4 + $0x8] sm:$0x30] %vm507, %v801
    %v804 = vrot.slane %v798, 4
    %805 = vrot.lane.b32.xlu0 %v804, 32
    %v806 = vpop.permute.xlu0 %805
    %v807 = vsel %vm287, %v806, 0
    %809 = vmatpush.msra.mxu0 0.0
    %810 = vmatpush.msra.mxu0 0.0
    %811 = vmatpush.msra.mxu0 0.0
    %812 = vmatpush.msra.mxu0 0.0
    %813 = vmatpush.msra.mxu0 0.0
    %814 = vmatpush.msra.mxu0 0.0
    %815 = vmatpush.msra.mxu0 0.0
    %816 = vmatpush.msra.mxu0 0.0
    %817 = vmatpush.msra.mxu0 0.0
    %818 = vmatpush.msra.mxu0 0.0
    %819 = vmatpush.msra.mxu0 0.0
    %820 = vmatpush.msra.mxu0 0.0
    %821 = vmatpush.msra.mxu0 %v284
    %822 = vmatpush.msra.mxu0 %v283
    %823 = vmatpush.msra.mxu0 %v282
    %824 = vmatpush.msra.mxu0 %v281
    %825 = vmatmul.f32.gmra.mxu0 %v807
    %v826 = vpop.f32.mrf.mxu0
    %v827 = vadd.f32 0.0, %v826
    %828 = vdwg.mxu0
    %v830 = vrot.slane %v827, 2
    %v832 = vadd.f32 %v279, %v830
    %v833 = vtanh.pop %v832
    %v834 = vxor.u32 %v832, 2147483648
    %v835 = vmul.f32 %v834, 1.442695
    %v836 = vpow.pop %v835
    %v837 = vadd.f32 %v836, 1.0
    %v838 = vrcp.pop %v837
    %v839 = vmul.f32 %v837, %v838
    %v840 = vsub.f32 1.0, %v839
    %v841 = vmul.f32 %v838, %v840
    %v842 = vadd.f32 %v838, %v841
    %vm843 = vweird.f32 %v837
    %vm844 = vweird.f32 %v838
    %vm845 = vmor %vm843, %vm844
    %v846 = vsel %vm845, %v838, %v842
    %v847 = vand.u32 2147483647, %v837
    %vm848 = vcmp.eq.f32.partialorder %v847, 8.507059e+37
    %v849 = vand.u32 %v837, 2147483648
    %v850 = vor.u32 1.1754944e-38, %v849
    %v851 = vsel %vm848, %v850, %v846
    %v852 = vmul.f32 1.0, %v851
    %v853 = vsel %vm244, %v833, %v852
    %v855 = vrot.slane %v792, 6
    %v857 = vmul.f32 %v853, %v855
    %859 = vrot.lane.b32.xlu0 %v853, 64
    %v860 = vpop.permute.xlu0 %859
    %v862 = vmul.f32 %v853, %v860
    %864 = vrot.lane.b32.xlu0 %v862, 32
    %v865 = vpop.permute.xlu0 %864
    %v867 = vadd.f32 %v857, %v865
    %v868 = vtanh.pop %v867
    %870 = vrot.lane.b32.xlu0 %v868, 64
    %v871 = vpop.permute.xlu0 %870
    %v873 = vmul.f32 %v853, %v871
    %875 = vrot.lane.b32.xlu0 %v873, 32
    %v876 = vpop.permute.xlu0 %875
    %878 = vst.msk [vmem:[#allocation4 + $0x8] sm:$0xc0] %vm583, %v876
    %879 = vst.msk [vmem:[#allocation2 - $0x6] sm:$0xc0] %vm583, %v876
    %881 = vrot.lane.b32.xlu0 %v867, 96
    %v882 = vpop.permute.xlu0 %881
    %884 = vst.msk [vmem:[#allocation3 - $0x6] sm:$0xc0] %vm583, %v882
    %v885 = vld [vmem:[#allocation4] sm:$0xff]
    %v886 = vld [vmem:[#allocation4 + $0x8] sm:$0xff]
    %v887 = vld [vmem:[#allocation14] sm:$0xff]
    %v888 = vld [vmem:[#allocation14 + $0x8] sm:$0xff]
    %v889 = vld [vmem:[#allocation14 + $0x10] sm:$0xff]
    %v890 = vld [vmem:[#allocation14 + $0x18] sm:$0xff]
    %v891 = vld [vmem:[%s14] sm:$0x1]
    %v893 = vperm.slane %v891, 0
    %v896 = vsel %vm287, %v885, 0
    %v899 = vsel %vm287, %v886, 0
    %901 = vmatpush.msra.mxu0 0.0
    %902 = vmatpush.msra.mxu0 0.0
    %903 = vmatpush.msra.mxu0 0.0
    %904 = vmatpush.msra.mxu0 0.0
    %905 = vmatpush.msra.mxu0 0.0
    %906 = vmatpush.msra.mxu0 0.0
    %907 = vmatpush.msra.mxu0 0.0
    %908 = vmatpush.msra.mxu0 0.0
    %909 = vmatpush.msra.mxu0 0.0
    %910 = vmatpush.msra.mxu0 0.0
    %911 = vmatpush.msra.mxu0 0.0
    %912 = vmatpush.msra.mxu0 0.0
    %913 = vmatpush.msra.mxu0 %v890
    %914 = vmatpush.msra.mxu0 %v889
    %915 = vmatpush.msra.mxu0 %v888
    %916 = vmatpush.msra.mxu0 %v887
    %917 = vmatmul.f32.gmra.mxu0 %v896
    %v918 = vpop.f32.mrf.mxu0
    %v919 = vadd.f32 %v893, %v918
    %920 = vmatmul.f32.gmra.mxu0 %v899
    %v921 = vpop.f32.mrf.mxu0
    %v922 = vadd.f32 %v893, %v921
    %923 = vdwg.mxu0
    %v924 = vld [vmem:[#allocation16] sm:$0xff]
    %v925 = vld [vmem:[#allocation16 + $0x8] sm:$0xff]
    %v926 = vld [vmem:[#allocation16 + $0x10] sm:$0xff]
    %v927 = vld [vmem:[#allocation16 + $0x18] sm:$0xff]
    %s928 = scalar_lea.vmem [#allocation2], 2
    %v929 = vld [vmem:[%s928] sm:$0x3]
    %s930 = scalar_lea.vmem [#allocation3], 2
    %v931 = vld [vmem:[%s930] sm:$0x3]
    %v933 = vsel %vm287, %v929, 0
    %935 = vmatpush.msra.mxu0 0.0
    %936 = vmatpush.msra.mxu0 0.0
    %937 = vmatpush.msra.mxu0 0.0
    %938 = vmatpush.msra.mxu0 0.0
    %939 = vmatpush.msra.mxu0 0.0
    %940 = vmatpush.msra.mxu0 0.0
    %941 = vmatpush.msra.mxu0 0.0
    %942 = vmatpush.msra.mxu0 0.0
    %943 = vmatpush.msra.mxu0 0.0
    %944 = vmatpush.msra.mxu0 0.0
    %945 = vmatpush.msra.mxu0 0.0
    %946 = vmatpush.msra.mxu0 0.0
    %947 = vmatpush.msra.mxu0 %v927
    %948 = vmatpush.msra.mxu0 %v926
    %949 = vmatpush.msra.mxu0 %v925
    %950 = vmatpush.msra.mxu0 %v924
    %951 = vmatmul.f32.gmra.mxu0 %v933
    %v952 = vpop.f32.mrf.mxu0
    %v953 = vadd.f32 0.0, %v952
    %954 = vdwg.mxu0
    %v955 = vadd.f32 %v919, %v953
    %v956 = vtanh.pop %v955
    %v957 = vxor.u32 %v955, 2147483648
    %v958 = vmul.f32 %v957, 1.442695
    %v959 = vpow.pop %v958
    %v960 = vadd.f32 %v959, 1.0
    %v961 = vrcp.pop %v960
    %v962 = vmul.f32 %v960, %v961
    %v963 = vsub.f32 1.0, %v962
    %v964 = vmul.f32 %v961, %v963
    %v965 = vadd.f32 %v961, %v964
    %vm966 = vweird.f32 %v960
    %vm967 = vweird.f32 %v961
    %vm968 = vmor %vm966, %vm967
    %v969 = vsel %vm968, %v961, %v965
    %v970 = vand.u32 2147483647, %v960
    %vm971 = vcmp.eq.f32.partialorder %v970, 8.507059e+37
    %v972 = vand.u32 %v960, 2147483648
    %v973 = vor.u32 1.1754944e-38, %v972
    %v974 = vsel %vm971, %v973, %v969
    %v975 = vmul.f32 1.0, %v974
    %v976 = vsel %vm244, %v956, %v975
    %978 = vrot.lane.b32.xlu0 %v931, 32
    %v979 = vpop.permute.xlu0 %978
    %v981 = vmul.f32 %v976, %v979
    %983 = vrot.lane.b32.xlu0 %v976, 64
    %v984 = vpop.permute.xlu0 %983
    %v986 = vmul.f32 %v976, %v984
    %988 = vrot.lane.b32.xlu0 %v986, 32
    %v989 = vpop.permute.xlu0 %988
    %v991 = vadd.f32 %v981, %v989
    %v992 = vtanh.pop %v991
    %994 = vrot.lane.b32.xlu0 %v992, 64
    %v995 = vpop.permute.xlu0 %994
    %v997 = vmul.f32 %v976, %v995
    %999 = vrot.lane.b32.xlu0 %v997, 32
    %v1000 = vpop.permute.xlu0 %999
    %v1001 = vsel %vm287, %v1000, 0
    %1003 = vmatpush.msra.mxu0 0.0
    %1004 = vmatpush.msra.mxu0 0.0
    %1005 = vmatpush.msra.mxu0 0.0
    %1006 = vmatpush.msra.mxu0 0.0
    %1007 = vmatpush.msra.mxu0 0.0
    %1008 = vmatpush.msra.mxu0 0.0
    %1009 = vmatpush.msra.mxu0 0.0
    %1010 = vmatpush.msra.mxu0 0.0
    %1011 = vmatpush.msra.mxu0 0.0
    %1012 = vmatpush.msra.mxu0 0.0
    %1013 = vmatpush.msra.mxu0 0.0
    %1014 = vmatpush.msra.mxu0 0.0
    %1015 = vmatpush.msra.mxu0 %v927
    %1016 = vmatpush.msra.mxu0 %v926
    %1017 = vmatpush.msra.mxu0 %v925
    %1018 = vmatpush.msra.mxu0 %v924
    %1019 = vmatmul.f32.gmra.mxu0 %v1001
    %v1020 = vpop.f32.mrf.mxu0
    %v1021 = vadd.f32 0.0, %v1020
    %1022 = vdwg.mxu0
    %v1024 = vrot.slane %v1021, 6
    %v1026 = vadd.f32 %v919, %v1024
    %v1027 = vtanh.pop %v1026
    %v1028 = vxor.u32 %v1026, 2147483648
    %v1029 = vmul.f32 %v1028, 1.442695
    %v1030 = vpow.pop %v1029
    %v1031 = vadd.f32 %v1030, 1.0
    %v1032 = vrcp.pop %v1031
    %v1033 = vmul.f32 %v1031, %v1032
    %v1034 = vsub.f32 1.0, %v1033
    %v1035 = vmul.f32 %v1032, %v1034
    %v1036 = vadd.f32 %v1032, %v1035
    %vm1037 = vweird.f32 %v1031
    %vm1038 = vweird.f32 %v1032
    %vm1039 = vmor %vm1037, %vm1038
    %v1040 = vsel %vm1039, %v1032, %v1036
    %v1041 = vand.u32 2147483647, %v1031
    %vm1042 = vcmp.eq.f32.partialorder %v1041, 8.507059e+37
    %v1043 = vand.u32 %v1031, 2147483648
    %v1044 = vor.u32 1.1754944e-38, %v1043
    %v1045 = vsel %vm1042, %v1044, %v1040
    %v1046 = vmul.f32 1.0, %v1045
    %v1047 = vsel %vm244, %v1027, %v1046
    %v1049 = vrot.slane %v991, 6
    %v1051 = vmul.f32 %v1047, %v1049
    %1053 = vrot.lane.b32.xlu0 %v1047, 64
    %v1054 = vpop.permute.xlu0 %1053
    %v1056 = vmul.f32 %v1047, %v1054
    %1058 = vrot.lane.b32.xlu0 %v1056, 32
    %v1059 = vpop.permute.xlu0 %1058
    %v1061 = vadd.f32 %v1051, %v1059
    %v1062 = vtanh.pop %v1061
    %1064 = vrot.lane.b32.xlu0 %v1062, 64
    %v1065 = vpop.permute.xlu0 %1064
    %v1067 = vmul.f32 %v1047, %v1065
    %v1069 = vrot.slane %v1067, 2
    %1070 = vrot.lane.b32.xlu0 %v1069, 32
    %v1071 = vpop.permute.xlu0 %1070
    %v1072 = vsel %vm287, %v1071, 0
    %1074 = vmatpush.msra.mxu0 0.0
    %1075 = vmatpush.msra.mxu0 0.0
    %1076 = vmatpush.msra.mxu0 0.0
    %1077 = vmatpush.msra.mxu0 0.0
    %1078 = vmatpush.msra.mxu0 0.0
    %1079 = vmatpush.msra.mxu0 0.0
    %1080 = vmatpush.msra.mxu0 0.0
    %1081 = vmatpush.msra.mxu0 0.0
    %1082 = vmatpush.msra.mxu0 0.0
    %1083 = vmatpush.msra.mxu0 0.0
    %1084 = vmatpush.msra.mxu0 0.0
    %1085 = vmatpush.msra.mxu0 0.0
    %1086 = vmatpush.msra.mxu0 %v927
    %1087 = vmatpush.msra.mxu0 %v926
    %1088 = vmatpush.msra.mxu0 %v925
    %1089 = vmatpush.msra.mxu0 %v924
    %1090 = vmatmul.f32.gmra.mxu0 %v1072
    %v1091 = vpop.f32.mrf.mxu0
    %v1092 = vadd.f32 0.0, %v1091
    %1093 = vdwg.mxu0
    %v1095 = vrot.slane %v1092, 4
    %v1097 = vadd.f32 %v919, %v1095
    %v1098 = vtanh.pop %v1097
    %v1099 = vxor.u32 %v1097, 2147483648
    %v1100 = vmul.f32 %v1099, 1.442695
    %v1101 = vpow.pop %v1100
    %v1102 = vadd.f32 %v1101, 1.0
    %v1103 = vrcp.pop %v1102
    %v1104 = vmul.f32 %v1102, %v1103
    %v1105 = vsub.f32 1.0, %v1104
    %v1106 = vmul.f32 %v1103, %v1105
    %v1107 = vadd.f32 %v1103, %v1106
    %vm1108 = vweird.f32 %v1102
    %vm1109 = vweird.f32 %v1103
    %vm1110 = vmor %vm1108, %vm1109
    %v1111 = vsel %vm1110, %v1103, %v1107
    %v1112 = vand.u32 2147483647, %v1102
    %vm1113 = vcmp.eq.f32.partialorder %v1112, 8.507059e+37
    %v1114 = vand.u32 %v1102, 2147483648
    %v1115 = vor.u32 1.1754944e-38, %v1114
    %v1116 = vsel %vm1113, %v1115, %v1111
    %v1117 = vmul.f32 1.0, %v1116
    %v1118 = vsel %vm244, %v1098, %v1117
    %v1120 = vrot.slane %v1061, 6
    %v1122 = vmul.f32 %v1118, %v1120
    %1124 = vrot.lane.b32.xlu0 %v1118, 64
    %v1125 = vpop.permute.xlu0 %1124
    %v1127 = vmul.f32 %v1118, %v1125
    %1129 = vrot.lane.b32.xlu0 %v1127, 32
    %v1130 = vpop.permute.xlu0 %1129
    %v1132 = vadd.f32 %v1122, %v1130
    %v1133 = vtanh.pop %v1132
    %1135 = vrot.lane.b32.xlu0 %v1133, 64
    %v1136 = vpop.permute.xlu0 %1135
    %v1138 = vmul.f32 %v1118, %v1136
    %v1140 = vrot.slane %v1138, 4
    %1141 = vrot.lane.b32.xlu0 %v1140, 32
    %v1142 = vpop.permute.xlu0 %1141
    %v1143 = vsel %vm287, %v1142, 0
    %1145 = vmatpush.msra.mxu0 0.0
    %1146 = vmatpush.msra.mxu0 0.0
    %1147 = vmatpush.msra.mxu0 0.0
    %1148 = vmatpush.msra.mxu0 0.0
    %1149 = vmatpush.msra.mxu0 0.0
    %1150 = vmatpush.msra.mxu0 0.0
    %1151 = vmatpush.msra.mxu0 0.0
    %1152 = vmatpush.msra.mxu0 0.0
    %1153 = vmatpush.msra.mxu0 0.0
    %1154 = vmatpush.msra.mxu0 0.0
    %1155 = vmatpush.msra.mxu0 0.0
    %1156 = vmatpush.msra.mxu0 0.0
    %1157 = vmatpush.msra.mxu0 %v927
    %1158 = vmatpush.msra.mxu0 %v926
    %1159 = vmatpush.msra.mxu0 %v925
    %1160 = vmatpush.msra.mxu0 %v924
    %1161 = vmatmul.f32.gmra.mxu0 %v1143
    %v1162 = vpop.f32.mrf.mxu0
    %v1163 = vadd.f32 0.0, %v1162
    %1164 = vdwg.mxu0
    %v1166 = vrot.slane %v1163, 2
    %v1168 = vadd.f32 %v919, %v1166
    %v1169 = vtanh.pop %v1168
    %v1170 = vxor.u32 %v1168, 2147483648
    %v1171 = vmul.f32 %v1170, 1.442695
    %v1172 = vpow.pop %v1171
    %v1173 = vadd.f32 %v1172, 1.0
    %v1174 = vrcp.pop %v1173
    %v1175 = vmul.f32 %v1173, %v1174
    %v1176 = vsub.f32 1.0, %v1175
    %v1177 = vmul.f32 %v1174, %v1176
    %v1178 = vadd.f32 %v1174, %v1177
    %vm1179 = vweird.f32 %v1173
    %vm1180 = vweird.f32 %v1174
    %vm1181 = vmor %vm1179, %vm1180
    %v1182 = vsel %vm1181, %v1174, %v1178
    %v1183 = vand.u32 2147483647, %v1173
    %vm1184 = vcmp.eq.f32.partialorder %v1183, 8.507059e+37
    %v1185 = vand.u32 %v1173, 2147483648
    %v1186 = vor.u32 1.1754944e-38, %v1185
    %v1187 = vsel %vm1184, %v1186, %v1182
    %v1188 = vmul.f32 1.0, %v1187
    %v1189 = vsel %vm244, %v1169, %v1188
    %v1191 = vrot.slane %v1132, 6
    %v1193 = vmul.f32 %v1189, %v1191
    %1195 = vrot.lane.b32.xlu0 %v1189, 64
    %v1196 = vpop.permute.xlu0 %1195
    %v1198 = vmul.f32 %v1189, %v1196
    %1200 = vrot.lane.b32.xlu0 %v1198, 32
    %v1201 = vpop.permute.xlu0 %1200
    %v1203 = vadd.f32 %v1193, %v1201
    %v1204 = vtanh.pop %v1203
    %1206 = vrot.lane.b32.xlu0 %v1204, 64
    %v1207 = vpop.permute.xlu0 %1206
    %v1209 = vmul.f32 %v1189, %v1207
    %v1211 = vrot.slane %v1209, 6
    %1212 = vrot.lane.b32.xlu0 %v1211, 32
    %v1213 = vpop.permute.xlu0 %1212
    %v1214 = vsel %vm287, %v1213, 0
    %1216 = vmatpush.msra.mxu0 0.0
    %1217 = vmatpush.msra.mxu0 0.0
    %1218 = vmatpush.msra.mxu0 0.0
    %1219 = vmatpush.msra.mxu0 0.0
    %1220 = vmatpush.msra.mxu0 0.0
    %1221 = vmatpush.msra.mxu0 0.0
    %1222 = vmatpush.msra.mxu0 0.0
    %1223 = vmatpush.msra.mxu0 0.0
    %1224 = vmatpush.msra.mxu0 0.0
    %1225 = vmatpush.msra.mxu0 0.0
    %1226 = vmatpush.msra.mxu0 0.0
    %1227 = vmatpush.msra.mxu0 0.0
    %1228 = vmatpush.msra.mxu0 %v927
    %1229 = vmatpush.msra.mxu0 %v926
    %1230 = vmatpush.msra.mxu0 %v925
    %1231 = vmatpush.msra.mxu0 %v924
    %1232 = vmatmul.f32.gmra.mxu0 %v1214
    %v1233 = vpop.f32.mrf.mxu0
    %v1234 = vadd.f32 0.0, %v1233
    %1235 = vdwg.mxu0
    %v1236 = vadd.f32 %v922, %v1234
    %v1237 = vtanh.pop %v1236
    %v1238 = vxor.u32 %v1236, 2147483648
    %v1239 = vmul.f32 %v1238, 1.442695
    %v1240 = vpow.pop %v1239
    %v1241 = vadd.f32 %v1240, 1.0
    %v1242 = vrcp.pop %v1241
    %v1243 = vmul.f32 %v1241, %v1242
    %v1244 = vsub.f32 1.0, %v1243
    %v1245 = vmul.f32 %v1242, %v1244
    %v1246 = vadd.f32 %v1242, %v1245
    %vm1247 = vweird.f32 %v1241
    %vm1248 = vweird.f32 %v1242
    %vm1249 = vmor %vm1247, %vm1248
    %v1250 = vsel %vm1249, %v1242, %v1246
    %v1251 = vand.u32 2147483647, %v1241
    %vm1252 = vcmp.eq.f32.partialorder %v1251, 8.507059e+37
    %v1253 = vand.u32 %v1241, 2147483648
    %v1254 = vor.u32 1.1754944e-38, %v1253
    %v1255 = vsel %vm1252, %v1254, %v1250
    %v1256 = vmul.f32 1.0, %v1255
    %v1257 = vsel %vm244, %v1237, %v1256
    %v1259 = vrot.slane %v1203, 6
    %v1261 = vmul.f32 %v1257, %v1259
    %1263 = vrot.lane.b32.xlu0 %v1257, 64
    %v1264 = vpop.permute.xlu0 %1263
    %v1266 = vmul.f32 %v1257, %v1264
    %1268 = vrot.lane.b32.xlu0 %v1266, 32
    %v1269 = vpop.permute.xlu0 %1268
    %v1271 = vadd.f32 %v1261, %v1269
    %v1272 = vtanh.pop %v1271
    %1274 = vrot.lane.b32.xlu0 %v1272, 64
    %v1275 = vpop.permute.xlu0 %1274
    %v1277 = vmul.f32 %v1257, %v1275
    %1279 = vrot.lane.b32.xlu0 %v1277, 32
    %v1280 = vpop.permute.xlu0 %1279
    %v1281 = vsel %vm287, %v1280, 0
    %1283 = vmatpush.msra.mxu0 0.0
    %1284 = vmatpush.msra.mxu0 0.0
    %1285 = vmatpush.msra.mxu0 0.0
    %1286 = vmatpush.msra.mxu0 0.0
    %1287 = vmatpush.msra.mxu0 0.0
    %1288 = vmatpush.msra.mxu0 0.0
    %1289 = vmatpush.msra.mxu0 0.0
    %1290 = vmatpush.msra.mxu0 0.0
    %1291 = vmatpush.msra.mxu0 0.0
    %1292 = vmatpush.msra.mxu0 0.0
    %1293 = vmatpush.msra.mxu0 0.0
    %1294 = vmatpush.msra.mxu0 0.0
    %1295 = vmatpush.msra.mxu0 %v927
    %1296 = vmatpush.msra.mxu0 %v926
    %1297 = vmatpush.msra.mxu0 %v925
    %1298 = vmatpush.msra.mxu0 %v924
    %1299 = vmatmul.f32.gmra.mxu0 %v1281
    %v1300 = vpop.f32.mrf.mxu0
    %v1301 = vadd.f32 0.0, %v1300
    %1302 = vdwg.mxu0
    %v1304 = vrot.slane %v1301, 6
    %v1306 = vadd.f32 %v922, %v1304
    %v1307 = vtanh.pop %v1306
    %v1308 = vxor.u32 %v1306, 2147483648
    %v1309 = vmul.f32 %v1308, 1.442695
    %v1310 = vpow.pop %v1309
    %v1311 = vadd.f32 %v1310, 1.0
    %v1312 = vrcp.pop %v1311
    %v1313 = vmul.f32 %v1311, %v1312
    %v1314 = vsub.f32 1.0, %v1313
    %v1315 = vmul.f32 %v1312, %v1314
    %v1316 = vadd.f32 %v1312, %v1315
    %vm1317 = vweird.f32 %v1311
    %vm1318 = vweird.f32 %v1312
    %vm1319 = vmor %vm1317, %vm1318
    %v1320 = vsel %vm1319, %v1312, %v1316
    %v1321 = vand.u32 2147483647, %v1311
    %vm1322 = vcmp.eq.f32.partialorder %v1321, 8.507059e+37
    %v1323 = vand.u32 %v1311, 2147483648
    %v1324 = vor.u32 1.1754944e-38, %v1323
    %v1325 = vsel %vm1322, %v1324, %v1320
    %v1326 = vmul.f32 1.0, %v1325
    %v1327 = vsel %vm244, %v1307, %v1326
    %v1329 = vrot.slane %v1271, 6
    %v1331 = vmul.f32 %v1327, %v1329
    %1333 = vrot.lane.b32.xlu0 %v1327, 64
    %v1334 = vpop.permute.xlu0 %1333
    %v1336 = vmul.f32 %v1327, %v1334
    %1338 = vrot.lane.b32.xlu0 %v1336, 32
    %v1339 = vpop.permute.xlu0 %1338
    %v1341 = vadd.f32 %v1331, %v1339
    %v1342 = vtanh.pop %v1341
    %1344 = vrot.lane.b32.xlu0 %v1342, 64
    %v1345 = vpop.permute.xlu0 %1344
    %v1347 = vmul.f32 %v1327, %v1345
    %v1349 = vrot.slane %v1347, 2
    %1350 = vrot.lane.b32.xlu0 %v1349, 32
    %v1351 = vpop.permute.xlu0 %1350
    %v1352 = vsel %vm287, %v1351, 0
    %1354 = vmatpush.msra.mxu0 0.0
    %1355 = vmatpush.msra.mxu0 0.0
    %1356 = vmatpush.msra.mxu0 0.0
    %1357 = vmatpush.msra.mxu0 0.0
    %1358 = vmatpush.msra.mxu0 0.0
    %1359 = vmatpush.msra.mxu0 0.0
    %1360 = vmatpush.msra.mxu0 0.0
    %1361 = vmatpush.msra.mxu0 0.0
    %1362 = vmatpush.msra.mxu0 0.0
    %1363 = vmatpush.msra.mxu0 0.0
    %1364 = vmatpush.msra.mxu0 0.0
    %1365 = vmatpush.msra.mxu0 0.0
    %1366 = vmatpush.msra.mxu0 %v927
    %1367 = vmatpush.msra.mxu0 %v926
    %1368 = vmatpush.msra.mxu0 %v925
    %1369 = vmatpush.msra.mxu0 %v924
    %1370 = vmatmul.f32.gmra.mxu0 %v1352
    %v1371 = vpop.f32.mrf.mxu0
    %v1372 = vadd.f32 0.0, %v1371
    %1373 = vdwg.mxu0
    %v1375 = vrot.slane %v1372, 4
    %v1377 = vadd.f32 %v922, %v1375
    %v1378 = vtanh.pop %v1377
    %v1379 = vxor.u32 %v1377, 2147483648
    %v1380 = vmul.f32 %v1379, 1.442695
    %v1381 = vpow.pop %v1380
    %v1382 = vadd.f32 %v1381, 1.0
    %v1383 = vrcp.pop %v1382
    %v1384 = vmul.f32 %v1382, %v1383
    %v1385 = vsub.f32 1.0, %v1384
    %v1386 = vmul.f32 %v1383, %v1385
    %v1387 = vadd.f32 %v1383, %v1386
    %vm1388 = vweird.f32 %v1382
    %vm1389 = vweird.f32 %v1383
    %vm1390 = vmor %vm1388, %vm1389
    %v1391 = vsel %vm1390, %v1383, %v1387
    %v1392 = vand.u32 2147483647, %v1382
    %vm1393 = vcmp.eq.f32.partialorder %v1392, 8.507059e+37
    %v1394 = vand.u32 %v1382, 2147483648
    %v1395 = vor.u32 1.1754944e-38, %v1394
    %v1396 = vsel %vm1393, %v1395, %v1391
    %v1397 = vmul.f32 1.0, %v1396
    %v1398 = vsel %vm244, %v1378, %v1397
    %v1400 = vrot.slane %v1341, 6
    %v1402 = vmul.f32 %v1398, %v1400
    %1404 = vrot.lane.b32.xlu0 %v1398, 64
    %v1405 = vpop.permute.xlu0 %1404
    %v1407 = vmul.f32 %v1398, %v1405
    %1409 = vrot.lane.b32.xlu0 %v1407, 32
    %v1410 = vpop.permute.xlu0 %1409
    %v1412 = vadd.f32 %v1402, %v1410
    %v1413 = vtanh.pop %v1412
    %1415 = vrot.lane.b32.xlu0 %v1413, 64
    %v1416 = vpop.permute.xlu0 %1415
    %v1418 = vmul.f32 %v1398, %v1416
    %v1420 = vrot.slane %v1418, 4
    %1421 = vrot.lane.b32.xlu0 %v1420, 32
    %v1422 = vpop.permute.xlu0 %1421
    %v1423 = vsel %vm287, %v1422, 0
    %1425 = vmatpush.msra.mxu0 0.0
    %1426 = vmatpush.msra.mxu0 0.0
    %1427 = vmatpush.msra.mxu0 0.0
    %1428 = vmatpush.msra.mxu0 0.0
    %1429 = vmatpush.msra.mxu0 0.0
    %1430 = vmatpush.msra.mxu0 0.0
    %1431 = vmatpush.msra.mxu0 0.0
    %1432 = vmatpush.msra.mxu0 0.0
    %1433 = vmatpush.msra.mxu0 0.0
    %1434 = vmatpush.msra.mxu0 0.0
    %1435 = vmatpush.msra.mxu0 0.0
    %1436 = vmatpush.msra.mxu0 0.0
    %1437 = vmatpush.msra.mxu0 %v927
    %1438 = vmatpush.msra.mxu0 %v926
    %1439 = vmatpush.msra.mxu0 %v925
    %1440 = vmatpush.msra.mxu0 %v924
    %1441 = vmatmul.f32.gmra.mxu0 %v1423
    %v1442 = vpop.f32.mrf.mxu0
    %v1443 = vadd.f32 0.0, %v1442
    %1444 = vdwg.mxu0
    %v1446 = vrot.slane %v1443, 2
    %v1448 = vadd.f32 %v922, %v1446
    %v1449 = vtanh.pop %v1448
    %v1450 = vxor.u32 %v1448, 2147483648
    %v1451 = vmul.f32 %v1450, 1.442695
    %v1452 = vpow.pop %v1451
    %v1453 = vadd.f32 %v1452, 1.0
    %v1454 = vrcp.pop %v1453
    %v1455 = vmul.f32 %v1453, %v1454
    %v1456 = vsub.f32 1.0, %v1455
    %v1457 = vmul.f32 %v1454, %v1456
    %v1458 = vadd.f32 %v1454, %v1457
    %vm1459 = vweird.f32 %v1453
    %vm1460 = vweird.f32 %v1454
    %vm1461 = vmor %vm1459, %vm1460
    %v1462 = vsel %vm1461, %v1454, %v1458
    %v1463 = vand.u32 2147483647, %v1453
    %vm1464 = vcmp.eq.f32.partialorder %v1463, 8.507059e+37
    %v1465 = vand.u32 %v1453, 2147483648
    %v1466 = vor.u32 1.1754944e-38, %v1465
    %v1467 = vsel %vm1464, %v1466, %v1462
    %v1468 = vmul.f32 1.0, %v1467
    %v1469 = vsel %vm244, %v1449, %v1468
    %v1471 = vrot.slane %v1412, 6
    %v1473 = vmul.f32 %v1469, %v1471
    %1475 = vrot.lane.b32.xlu0 %v1469, 64
    %v1476 = vpop.permute.xlu0 %1475
    %v1478 = vmul.f32 %v1469, %v1476
    %1480 = vrot.lane.b32.xlu0 %v1478, 32
    %v1481 = vpop.permute.xlu0 %1480
    %v1483 = vadd.f32 %v1473, %v1481
    %v1484 = vtanh.pop %v1483
    %1486 = vrot.lane.b32.xlu0 %v1484, 64
    %v1487 = vpop.permute.xlu0 %1486
    %v1489 = vmul.f32 %v1469, %v1487
    %1491 = vrot.lane.b32.xlu0 %v1489, 32
    %v1492 = vpop.permute.xlu0 %1491
    %1494 = vst.msk [vmem:[%s928 - $0x6] sm:$0xc0] %vm583, %v1492
    %1496 = vrot.lane.b32.xlu0 %v1483, 96
    %v1497 = vpop.permute.xlu0 %1496
    %1499 = vst.msk [vmem:[%s930 - $0x6] sm:$0xc0] %vm583, %v1497
    // Predicated region
    $region102: #{tpu_custom_call.1} parent=1 // pred_check
      %p1500 = pneg %p158
    $region103: #{tpu_custom_call.1} parent=1 // pred_check_branch
      %1502 = sbr.rel (%p1500) target = $region105
    $region104: #{tpu_custom_call.1} parent=1 // pred_region
      %v1503 = vld [vmem:[%s15] sm:$0xff]
      %v1504 = vld [vmem:[%s15 + $0x8] sm:$0xff]
      %v1505 = vld [vmem:[%s15 + $0x10] sm:$0xff]
      %v1506 = vld [vmem:[%s15 + $0x18] sm:$0xff]
      %v1507 = vld [vmem:[%s16] sm:$0x1]
      %v1509 = vperm.slane %v1507, 0
      %v1511 = vrot.slane %v1489, 6
      %1512 = vrot.lane.b32.xlu0 %v1511, 32
      %v1513 = vpop.permute.xlu0 %1512
      %v1514 = vsel %vm287, %v1513, 0
      %1516 = vmatpush.msra.mxu0 0.0
      %1517 = vmatpush.msra.mxu0 0.0
      %1518 = vmatpush.msra.mxu0 0.0
      %1519 = vmatpush.msra.mxu0 0.0
      %1520 = vmatpush.msra.mxu0 0.0
      %1521 = vmatpush.msra.mxu0 0.0
      %1522 = vmatpush.msra.mxu0 0.0
      %1523 = vmatpush.msra.mxu0 0.0
      %1524 = vmatpush.msra.mxu0 0.0
      %1525 = vmatpush.msra.mxu0 0.0
      %1526 = vmatpush.msra.mxu0 0.0
      %1527 = vmatpush.msra.mxu0 0.0
      %1528 = vmatpush.msra.mxu0 %v1506
      %1529 = vmatpush.msra.mxu0 %v1505
      %1530 = vmatpush.msra.mxu0 %v1504
      %1531 = vmatpush.msra.mxu0 %v1503
      %1532 = vmatmul.f32.gmra.mxu0 %v1514
      %v1533 = vpop.f32.mrf.mxu0
      %v1534 = vadd.f32 %v1509, %v1533
      %1535 = vdwg.mxu0
      %v1536 = vxor.u32 %v1534, 2147483648
      %v1537 = vmul.f32 %v1536, 1.442695
      %v1538 = vpow.pop %v1537
      %v1539 = vadd.f32 %v1538, 1.0
      %v1540 = vrcp.pop %v1539
      %v1541 = vmul.f32 %v1539, %v1540
      %v1542 = vsub.f32 1.0, %v1541
      %v1543 = vmul.f32 %v1540, %v1542
      %v1544 = vadd.f32 %v1540, %v1543
      %vm1545 = vweird.f32 %v1539
      %vm1546 = vweird.f32 %v1540
      %vm1547 = vmor %vm1545, %vm1546
      %v1548 = vsel %vm1547, %v1540, %v1544
      %v1549 = vand.u32 2147483647, %v1539
      %vm1550 = vcmp.eq.f32.partialorder %v1549, 8.507059e+37
      %v1551 = vand.u32 %v1539, 2147483648
      %v1552 = vor.u32 1.1754944e-38, %v1551
      %v1553 = vsel %vm1550, %v1552, %v1548
      %v1554 = vmul.f32 1.0, %v1553
      %vm1555 = vcmask 9216
      %1556 = vst.msk [vmem:[#allocation17] sm:$0x3] %vm1555, %v1554
    $region105: #{tpu_custom_call.1} parent=1 // pred_fallthru
      _
    // Predicated region
    $region106: #{tpu_custom_call.1} parent=1 // pred_check
      _
    $region107: #{tpu_custom_call.1} parent=1 // pred_check_branch
      %1558 = sbr.rel (0) target = $region109
    $region108: #{tpu_custom_call.1} parent=1 // pred_region
      %1560 = vsyncadd [#allocation7], 0
      %s1562 = sshll.u32 [#allocation17], 4
      %s1563 = int_to_ptr.vmem [resolvable:$true] %s1562
      %s1564 = sshll.u32 %s17, 4
      %s1565 = int_to_ptr.hbm [resolvable:$true] %s1564
      %1567 = dma.vmem_to_hbm [thread:$0]  %s1563, 32, %s1565, [#allocation7]
    $region109: #{tpu_custom_call.1} parent=1 // pred_fallthru
      _
    // Predicated region
    $region110: #{tpu_custom_call.1} parent=1 // pred_check
      _
    $region111: #{tpu_custom_call.1} parent=1 // pred_check_branch
      %1569 = sbr.rel (0) target = $region113
    $region112: #{tpu_custom_call.1} parent=1 // pred_region
      %1571 = dma.done [#allocation7], 32
    $region113: #{tpu_custom_call.1} parent=1 // pred_fallthru
      _
    %1572 = vsyncpa [#allocation6], 1
    %1573 = vsyncpa [#allocation9], 1
    %1574 = vsyncpa [#allocation12], 1
    %1575 = vsyncpa [#allocation15], 1
    %1576 = vsyncpa [#allocation7], 1

</llo_original>
